<compile_context>
chip_gen: v6e
topology: v6e:2x2x1
jax: 0.10.0
libtpu: 0.0.40
codegen_flags: <defaults>
</compile_context>

<pallas_src>
import inspect
import math

import jax
import jax.numpy as jnp
from jax.experimental import pallas as pl
from jax.experimental.pallas import tpu as pltpu


# --------------------------------------------------------------------------- #
# Helpers
# --------------------------------------------------------------------------- #
def _round_up(x, m):
    return (x + m - 1) // m * m


def _single_buffer_supported():
    try:
        return (hasattr(pl, "Buffered")
                and "pipeline_mode" in inspect.signature(pl.BlockSpec).parameters)
    except Exception:
        return False


_SINGLE_BUFFER_OK = _single_buffer_supported()


def _vmem_capacity_bytes():
    """Physical VMEM per core; conservative fallback if introspection fails."""
    try:
        return int(pltpu.get_tpu_info().vmem_capacity_bytes)
    except Exception:
        return 64 << 20  # v7x-safe default


def _choose_tm(n, block_rows, align):
    """Row-tile size: dtype-aligned, prefers a divisor of n (no pad copy)."""
    block_rows = max(align, (block_rows // align) * align)
    if n <= block_rows:
        return _round_up(n, align)
    for tm in range(block_rows, align - 1, -align):
        if n % tm == 0:
            return tm
    return block_rows  # no aligned divisor: fall back to padding


def _choose_tk(H, block_hidden):
    """Hidden-dim chunk: multiple of 128 that divides H, capped by block_hidden."""
    if H <= block_hidden or H % 128 != 0:
        return H
    max_tk = (min(block_hidden, H) // 128) * 128
    for tk in range(max_tk, 0, -128):
        if H % tk == 0:
            return tk
    return H


# --------------------------------------------------------------------------- #
# Kernel
# --------------------------------------------------------------------------- #
def ffn_kernel(x_ref, w1_ref, b1_ref, w2_ref, b2_ref, o_ref, acc_ref):
    # Grid: (row_tiles, hidden_chunks).  For each row tile i, the hidden axis k
    # streams W1[:, k*tk:(k+1)*tk] / W2[k*tk:(k+1)*tk, :] and accumulates the
    # partial second projection into the f32 scratch.
    k = pl.program_id(1)

    @pl.when(k == 0)
    def _init():
        acc_ref[...] = jnp.zeros_like(acc_ref)

    x = x_ref[...]
    # First projection chunk (+ bias) and ReLU; MXU accumulates in f32.
    h = jnp.dot(x, w1_ref[...], preferred_element_type=jnp.float32)
    h = jnp.maximum(h + b1_ref[...].astype(jnp.float32), 0.0)

    # Second projection chunk; feed the MXU in the operand dtype (bf16 keeps
    # double-rate throughput), accumulate in f32.
    acc_ref[...] += jnp.dot(h.astype(w2_ref.dtype), w2_ref[...],
                            preferred_element_type=jnp.float32)

    @pl.when(k == pl.num_programs(1) - 1)
    def _finalize():
        # TODO(synk): nn.Dropout is identity in eval mode; training-mode dropout
        # would use pltpu.prng_seed / pltpu.prng_random_bits masking here.
        out = acc_ref[...] + b2_ref[...].astype(jnp.float32)
        o_ref[...] = out.astype(o_ref.dtype)


# --------------------------------------------------------------------------- #
# Wrapper
# --------------------------------------------------------------------------- #
def feedforward_forward(x, w1, b1, w2, b2, *, block_rows=None, block_hidden=512,
                        compute_dtype=None):
    """x: (..., C); w1: (C, H); b1: (H,); w2: (H, C); b2: (C,) -> (..., C)."""
    orig_shape = x.shape
    C = orig_shape[-1]
    H = w1.shape[1]
    out_dtype = x.dtype

    if compute_dtype is not None:
        x = x.astype(compute_dtype)
        w1 = w1.astype(compute_dtype)
        w2 = w2.astype(compute_dtype)

    x2 = x.reshape(-1, C)
    n = x2.shape[0]

    x_itemsize = jnp.dtype(x2.dtype).itemsize
    w_itemsize = jnp.dtype(w1.dtype).itemsize
    o_itemsize = jnp.dtype(out_dtype).itemsize
    # Sublane-min tile is dtype dependent: 8 (f32) / 16 (bf16) / 32 (int8/fp8).
    align = max(8, 32 // x_itemsize)

    cap = _vmem_capacity_bytes()
    if block_rows is None:
        # Bigger row tiles on 128 MiB parts (v5e/v6e), smaller on v7x (64 MiB/TC).
        block_rows = 512 if cap >= (96 << 20) else 256

    tm = _choose_tm(n, block_rows, align)
    n_pad = _round_up(n, tm)
    if n_pad != n:
        # TODO(synk): a masked final-tile write would avoid this HBM pad copy.
        x2 = jnp.pad(x2, ((0, n_pad - n), (0, 0)))

    tk = _choose_tk(H, block_hidden)
    nk = H // tk
    resident = (nk == 1)  # weight chunks constant across the whole grid

    b1_2d = b1.reshape(1, H)
    b2_2d = b2.reshape(1, C)

    # Scoped-VMEM budget from the actual footprint (double buffers assumed).
    footprint = (2 * tm * C * x_itemsize          # x tiles
                 + 2 * tm * C * o_itemsize        # out tiles
                 + 2 * C * tk * w_itemsize        # W1 chunk
                 + 2 * tk * C * w_itemsize        # W2 chunk
                 + 2 * (tk + C) * 4               # biases
                 + tm * C * 4                     # f32 accumulator scratch
                 + tm * tk * 4)                   # in-kernel f32 hidden temp
    vmem_limit = int(min(cap, max(32 << 20, int(footprint * 1.5) + (8 << 20))))

    compiler_params = pltpu.CompilerParams(
        dimension_semantics=("parallel", "arbitrary"),
        vmem_limit_bytes=vmem_limit,
    )

    cost = pl.CostEstimate(
        flops=int(4 * n * C * H),  # two GEMMs x 2 flops/MAC
        transcendentals=0,
        bytes_accessed=int(n * C * (x_itemsize + o_itemsize)
                           + (w1.size + w2.size) * w_itemsize
                           + (b1.size + b2.size) * 4),
    )

    def _build_and_call(allow_single_buffer):
        def wspec(shape, index_map, constant):
            if constant and allow_single_buffer and _SINGLE_BUFFER_OK:
                # Grid-constant operand: keep one resident VMEM copy.
                return pl.BlockSpec(shape, index_map, pipeline_mode=pl.Buffered(1))
            return pl.BlockSpec(shape, index_map)

        grid_spec = pltpu.PrefetchScalarGridSpec(
            num_scalar_prefetch=0,
            grid=(n_pad // tm, nk),
            in_specs=[
                pl.BlockSpec((tm, C), lambda i, k: (i, 0)),        # x row tile
                wspec((C, tk), lambda i, k: (0, k), resident),      # W1 chunk
                wspec((1, tk), lambda i, k: (0, k), resident),      # b1 chunk
                wspec((tk, C), lambda i, k: (k, 0), resident),      # W2 chunk
                wspec((1, C), lambda i, k: (0, 0), True),           # b2 (constant)
            ],
            out_specs=pl.BlockSpec((tm, C), lambda i, k: (i, 0)),
            scratch_shapes=[pltpu.VMEM((tm, C), jnp.float32)],
        )
        return pl.pallas_call(
            ffn_kernel,
            out_shape=jax.ShapeDtypeStruct((n_pad, C), out_dtype),
            grid_spec=grid_spec,
            compiler_params=compiler_params,
            cost_estimate=cost,
        )(x2, w1, b1_2d, w2, b2_2d)

    if _SINGLE_BUFFER_OK:
        try:
            out = _build_and_call(True)
        except Exception:
            # Installed JAX rejected pl.Buffered(1): fall back to default buffering.
            out = _build_and_call(False)
    else:
        out = _build_and_call(False)

    return out[:n].reshape(orig_shape)


def feedforward_reference(x, w1, b1, w2, b2):
    """Pure-JAX reference mirroring the PyTorch forward (eval mode)."""
    h = jnp.maximum(x @ w1 + b1, 0.0)
    return h @ w2 + b2


# --------------------------------------------------------------------------- #
# Demo / self-test
# --------------------------------------------------------------------------- #
if __name__ == "__main__":
    # Small shapes consistent with the module; n_embd=128 keeps the output
    # last dim lane-dense, hidden = 4 * n_embd.
    B, T = 2, 8
    n_embd = 128
    hidden = 4 * n_embd
    dropout = 0.1  # nn.Dropout is identity in eval mode

    key = jax.random.PRNGKey(0)
    kx, k1, kb1, k2, kb2 = jax.random.split(key, 5)

    x = jax.random.normal(kx, (B, T, n_embd), dtype=jnp.float32)

    # nn.Linear(in, out) weight is (out, in); we store the transpose (in, out)
    # with the same uniform(-1/sqrt(fan_in), 1/sqrt(fan_in)) init.
    bound1 = 1.0 / math.sqrt(n_embd)
    w1 = jax.random.uniform(k1, (n_embd, hidden), jnp.float32, -bound1, bound1)
    b1 = jax.random.uniform(kb1, (hidden,), jnp.float32, -bound1, bound1)
    bound2 = 1.0 / math.sqrt(hidden)
    w2 = jax.random.uniform(k2, (hidden, n_embd), jnp.float32, -bound2, bound2)
    b2 = jax.random.uniform(kb2, (n_embd,), jnp.float32, -bound2, bound2)

    # f32 path: exact parity with the PyTorch eval-mode forward.
    out = jax.block_until_ready(feedforward_forward(x, w1, b1, w2, b2))
    ref = feedforward_reference(x, w1, b1, w2, b2)
    assert out.shape == (B, T, n_embd)
    assert out.dtype == x.dtype
    assert jnp.allclose(out, ref, atol=1e-4, rtol=1e-4), "f32 mismatch vs reference"

    # bf16 compute path (perf mode: ~2x MXU rate, half the weight traffic);
    # compare against a reference that sees the same bf16-rounded operands.
    out_bf = jax.block_until_ready(
        feedforward_forward(x, w1, b1, w2, b2, compute_dtype=jnp.bfloat16))
    ref_bf = feedforward_reference(
        x.astype(jnp.bfloat16).astype(jnp.float32),
        w1.astype(jnp.bfloat16).astype(jnp.float32), b1,
        w2.astype(jnp.bfloat16).astype(jnp.float32), b2)
    assert out_bf.shape == (B, T, n_embd)
    assert jnp.allclose(out_bf, ref_bf, atol=3e-2, rtol=3e-2), "bf16 mismatch vs reference"

    print("KERNEL_OK")
</pallas_src>

<mosaic_0001>
module attributes {stable_mosaic.version = 11 : i64} {
  func.func @ffn_kernel(%arg0: i32, %arg1: i32, %arg2: memref<16x128xf32, #tpu.memory_space<vmem>>, %arg3: memref<128x512xf32, #tpu.memory_space<vmem>>, %arg4: memref<1x512xf32, #tpu.memory_space<vmem>>, %arg5: memref<512x128xf32, #tpu.memory_space<vmem>>, %arg6: memref<1x128xf32, #tpu.memory_space<vmem>>, %arg7: memref<16x128xf32, #tpu.memory_space<vmem>>, %arg8: memref<16x128xf32, #tpu.memory_space<vmem>>) attributes {dimension_semantics = [#tpu.dimension_semantics<parallel>, #tpu.dimension_semantics<arbitrary>], iteration_bounds = array<i64: 1, 1>, scalar_prefetch = 0 : i64, scratch_operands = 1 : i64, tpu.core_type = #tpu.core_type<tc>, window_params = [{transform_indices = @transform_0, window_bounds = array<i64: 16, 128>}, {pipeline_mode = #tpu.pipeline_mode<synchronous>, transform_indices = @transform_1, window_bounds = array<i64: 128, 512>}, {pipeline_mode = #tpu.pipeline_mode<synchronous>, transform_indices = @transform_2, window_bounds = array<i64: 1, 512>}, {pipeline_mode = #tpu.pipeline_mode<synchronous>, transform_indices = @transform_3, window_bounds = array<i64: 512, 128>}, {pipeline_mode = #tpu.pipeline_mode<synchronous>, transform_indices = @transform_4, window_bounds = array<i64: 1, 128>}, {transform_indices = @transform_5, window_bounds = array<i64: 16, 128>}]} {
    %c0_i32 = arith.constant 0 : i32
    %0 = arith.cmpi eq, %arg1, %c0_i32 : i32
    %1 = arith.extui %0 : i1 to i32
    %c0_i32_0 = arith.constant 0 : i32
    %2 = arith.cmpi ne, %1, %c0_i32_0 : i32
    scf.if %2 {
      %cst_16 = arith.constant 0.000000e+00 : f32
      %19 = vector.broadcast %cst_16 : f32 to vector<16x128xf32>
      %c0_17 = arith.constant 0 : index
      %c0_18 = arith.constant 0 : index
      %20 = vector.load %arg8[%c0_17, %c0_18] : memref<16x128xf32, #tpu.memory_space<vmem>>, vector<16x128xf32>
      tpu.vector_store %arg8[%c0_17, %c0_18], %19 {strides = array<i32>} : memref<16x128xf32, #tpu.memory_space<vmem>>, vector<16x128xf32>,
    } else {
    }
    %c0 = arith.constant 0 : index
    %c0_1 = arith.constant 0 : index
    %3 = vector.load %arg2[%c0, %c0_1] : memref<16x128xf32, #tpu.memory_space<vmem>>, vector<16x128xf32>
    %c0_2 = arith.constant 0 : index
    %c0_3 = arith.constant 0 : index
    %4 = vector.load %arg3[%c0_2, %c0_3] : memref<128x512xf32, #tpu.memory_space<vmem>>, vector<128x512xf32>
    %cst = arith.constant dense<0.000000e+00> : vector<16x512xf32>
    %5 = tpu.matmul %3, %4, %cst {dimension_numbers = #tpu.dot_dimension_numbers<[1], [0], [0], [1], [0, 0, 1, 1], [], []>} : vector<16x128xf32>, vector<128x512xf32>, vector<16x512xf32> -> vector<16x512xf32>
    %c0_4 = arith.constant 0 : index
    %c0_5 = arith.constant 0 : index
    %6 = vector.load %arg4[%c0_4, %c0_5] : memref<1x512xf32, #tpu.memory_space<vmem>>, vector<1x512xf32>
    %7 = vector.broadcast %6 : vector<1x512xf32> to vector<16x512xf32>
    %8 = arith.addf %5, %7 : vector<16x512xf32>
    %cst_6 = arith.constant 0.000000e+00 : f32
    %9 = vector.broadcast %cst_6 : f32 to vector<16x512xf32>
    %10 = arith.maximumf %8, %9 : vector<16x512xf32>
    %c0_7 = arith.constant 0 : index
    %c0_8 = arith.constant 0 : index
    %11 = vector.load %arg8[%c0_7, %c0_8] : memref<16x128xf32, #tpu.memory_space<vmem>>, vector<16x128xf32>
    %c0_9 = arith.constant 0 : index
    %c0_10 = arith.constant 0 : index
    %12 = vector.load %arg5[%c0_9, %c0_10] : memref<512x128xf32, #tpu.memory_space<vmem>>, vector<512x128xf32>
    %cst_11 = arith.constant dense<0.000000e+00> : vector<16x128xf32>
    %13 = tpu.matmul %10, %12, %cst_11 {dimension_numbers = #tpu.dot_dimension_numbers<[1], [0], [0], [1], [0, 0, 1, 1], [], []>} : vector<16x512xf32>, vector<512x128xf32>, vector<16x128xf32> -> vector<16x128xf32>
    %14 = arith.addf %11, %13 : vector<16x128xf32>
    %c0_12 = arith.constant 0 : index
    %c0_13 = arith.constant 0 : index
    %15 = vector.load %arg8[%c0_12, %c0_13] : memref<16x128xf32, #tpu.memory_space<vmem>>, vector<16x128xf32>
    tpu.vector_store %arg8[%c0_12, %c0_13], %14 {strides = array<i32>} : memref<16x128xf32, #tpu.memory_space<vmem>>, vector<16x128xf32>,
    %c0_i32_14 = arith.constant 0 : i32
    %16 = arith.cmpi eq, %arg1, %c0_i32_14 : i32
    %17 = arith.extui %16 : i1 to i32
    %c0_i32_15 = arith.constant 0 : i32
    %18 = arith.cmpi ne, %17, %c0_i32_15 : i32
    scf.if %18 {
      %c0_16 = arith.constant 0 : index
      %c0_17 = arith.constant 0 : index
      %19 = vector.load %arg8[%c0_16, %c0_17] : memref<16x128xf32, #tpu.memory_space<vmem>>, vector<16x128xf32>
      %c0_18 = arith.constant 0 : index
      %c0_19 = arith.constant 0 : index
      %20 = vector.load %arg6[%c0_18, %c0_19] : memref<1x128xf32, #tpu.memory_space<vmem>>, vector<1x128xf32>
      %21 = vector.broadcast %20 : vector<1x128xf32> to vector<16x128xf32>
      %22 = arith.addf %19, %21 : vector<16x128xf32>
      %c0_20 = arith.constant 0 : index
      %c0_21 = arith.constant 0 : index
      %23 = vector.load %arg7[%c0_20, %c0_21] : memref<16x128xf32, #tpu.memory_space<vmem>>, vector<16x128xf32>
      tpu.vector_store %arg7[%c0_20, %c0_21], %22 {strides = array<i32>} : memref<16x128xf32, #tpu.memory_space<vmem>>, vector<16x128xf32>,
    } else {
    }
    return
  }
  func.func @transform_0(%arg0: i32, %arg1: i32) -> (i32, i32) {
    %c0_i32 = arith.constant 0 : i32
    %c0_i32_0 = arith.constant 0 : i32
    return %arg0, %c0_i32 : i32, i32
  }
  func.func @transform_1(%arg0: i32, %arg1: i32) -> (i32, i32) {
    %c0_i32 = arith.constant 0 : i32
    %c0_i32_0 = arith.constant 0 : i32
    return %c0_i32, %arg1 : i32, i32
  }
  func.func @transform_2(%arg0: i32, %arg1: i32) -> (i32, i32) {
    %c0_i32 = arith.constant 0 : i32
    %c0_i32_0 = arith.constant 0 : i32
    return %c0_i32, %arg1 : i32, i32
  }
  func.func @transform_3(%arg0: i32, %arg1: i32) -> (i32, i32) {
    %c0_i32 = arith.constant 0 : i32
    %c0_i32_0 = arith.constant 0 : i32
    return %arg1, %c0_i32 : i32, i32
  }
  func.func @transform_4(%arg0: i32, %arg1: i32) -> (i32, i32) {
    %c0_i32 = arith.constant 0 : i32
    %c0_i32_0 = arith.constant 0 : i32
    %c0_i32_1 = arith.constant 0 : i32
    return %c0_i32, %c0_i32_0 : i32, i32
  }
  func.func @transform_5(%arg0: i32, %arg1: i32) -> (i32, i32) {
    %c0_i32 = arith.constant 0 : i32
    %c0_i32_0 = arith.constant 0 : i32
    return %arg0, %c0_i32 : i32, i32
  }
}

module attributes {stable_mosaic.version = 11 : i64} {
  func.func @ffn_kernel(%arg0: i32, %arg1: i32, %arg2: memref<16x128xf32, #tpu.memory_space<vmem>>, %arg3: memref<128x512xf32, #tpu.memory_space<vmem>>, %arg4: memref<1x512xf32, #tpu.memory_space<vmem>>, %arg5: memref<512x128xf32, #tpu.memory_space<vmem>>, %arg6: memref<1x128xf32, #tpu.memory_space<vmem>>, %arg7: memref<16x128xf32, #tpu.memory_space<vmem>>, %arg8: memref<16x128xf32, #tpu.memory_space<vmem>>) attributes {dimension_semantics = [#tpu.dimension_semantics<parallel>, #tpu.dimension_semantics<arbitrary>], iteration_bounds = array<i64: 1, 1>, scalar_prefetch = 0 : i64, scratch_operands = 1 : i64, tpu.core_type = #tpu.core_type<tc>, window_params = [{transform_indices = @transform_0, window_bounds = array<i64: 16, 128>}, {transform_indices = @transform_1, window_bounds = array<i64: 128, 512>}, {transform_indices = @transform_2, window_bounds = array<i64: 1, 512>}, {transform_indices = @transform_3, window_bounds = array<i64: 512, 128>}, {pipeline_mode = #tpu.pipeline_mode<synchronous>, transform_indices = @transform_4, window_bounds = array<i64: 1, 128>}, {transform_indices = @transform_5, window_bounds = array<i64: 16, 128>}]} {
    %c0_i32 = arith.constant 0 : i32
    %0 = arith.cmpi eq, %arg1, %c0_i32 : i32
    %1 = arith.extui %0 : i1 to i32
    %c0_i32_0 = arith.constant 0 : i32
    %2 = arith.cmpi ne, %1, %c0_i32_0 : i32
    scf.if %2 {
      %cst_16 = arith.constant 0.000000e+00 : f32
      %19 = vector.broadcast %cst_16 : f32 to vector<16x128xf32>
      %c0_17 = arith.constant 0 : index
      %c0_18 = arith.constant 0 : index
      %20 = vector.load %arg8[%c0_17, %c0_18] : memref<16x128xf32, #tpu.memory_space<vmem>>, vector<16x128xf32>
      tpu.vector_store %arg8[%c0_17, %c0_18], %19 {strides = array<i32>} : memref<16x128xf32, #tpu.memory_space<vmem>>, vector<16x128xf32>,
    } else {
    }
    %c0 = arith.constant 0 : index
    %c0_1 = arith.constant 0 : index
    %3 = vector.load %arg2[%c0, %c0_1] : memref<16x128xf32, #tpu.memory_space<vmem>>, vector<16x128xf32>
    %c0_2 = arith.constant 0 : index
    %c0_3 = arith.constant 0 : index
    %4 = vector.load %arg3[%c0_2, %c0_3] : memref<128x512xf32, #tpu.memory_space<vmem>>, vector<128x512xf32>
    %cst = arith.constant dense<0.000000e+00> : vector<16x512xf32>
    %5 = tpu.matmul %3, %4, %cst {dimension_numbers = #tpu.dot_dimension_numbers<[1], [0], [0], [1], [0, 0, 1, 1], [], []>} : vector<16x128xf32>, vector<128x512xf32>, vector<16x512xf32> -> vector<16x512xf32>
    %c0_4 = arith.constant 0 : index
    %c0_5 = arith.constant 0 : index
    %6 = vector.load %arg4[%c0_4, %c0_5] : memref<1x512xf32, #tpu.memory_space<vmem>>, vector<1x512xf32>
    %7 = vector.broadcast %6 : vector<1x512xf32> to vector<16x512xf32>
    %8 = arith.addf %5, %7 : vector<16x512xf32>
    %cst_6 = arith.constant 0.000000e+00 : f32
    %9 = vector.broadcast %cst_6 : f32 to vector<16x512xf32>
    %10 = arith.maximumf %8, %9 : vector<16x512xf32>
    %c0_7 = arith.constant 0 : index
    %c0_8 = arith.constant 0 : index
    %11 = vector.load %arg8[%c0_7, %c0_8] : memref<16x128xf32, #tpu.memory_space<vmem>>, vector<16x128xf32>
    %c0_9 = arith.constant 0 : index
    %c0_10 = arith.constant 0 : index
    %12 = vector.load %arg5[%c0_9, %c0_10] : memref<512x128xf32, #tpu.memory_space<vmem>>, vector<512x128xf32>
    %cst_11 = arith.constant dense<0.000000e+00> : vector<16x128xf32>
    %13 = tpu.matmul %10, %12, %cst_11 {dimension_numbers = #tpu.dot_dimension_numbers<[1], [0], [0], [1], [0, 0, 1, 1], [], []>} : vector<16x512xf32>, vector<512x128xf32>, vector<16x128xf32> -> vector<16x128xf32>
    %14 = arith.addf %11, %13 : vector<16x128xf32>
    %c0_12 = arith.constant 0 : index
    %c0_13 = arith.constant 0 : index
    %15 = vector.load %arg8[%c0_12, %c0_13] : memref<16x128xf32, #tpu.memory_space<vmem>>, vector<16x128xf32>
    tpu.vector_store %arg8[%c0_12, %c0_13], %14 {strides = array<i32>} : memref<16x128xf32, #tpu.memory_space<vmem>>, vector<16x128xf32>,
    %c0_i32_14 = arith.constant 0 : i32
    %16 = arith.cmpi eq, %arg1, %c0_i32_14 : i32
    %17 = arith.extui %16 : i1 to i32
    %c0_i32_15 = arith.constant 0 : i32
    %18 = arith.cmpi ne, %17, %c0_i32_15 : i32
    scf.if %18 {
      %c0_16 = arith.constant 0 : index
      %c0_17 = arith.constant 0 : index
      %19 = vector.load %arg8[%c0_16, %c0_17] : memref<16x128xf32, #tpu.memory_space<vmem>>, vector<16x128xf32>
      %c0_18 = arith.constant 0 : index
      %c0_19 = arith.constant 0 : index
      %20 = vector.load %arg6[%c0_18, %c0_19] : memref<1x128xf32, #tpu.memory_space<vmem>>, vector<1x128xf32>
      %21 = vector.broadcast %20 : vector<1x128xf32> to vector<16x128xf32>
      %22 = arith.addf %19, %21 : vector<16x128xf32>
      %c0_20 = arith.constant 0 : index
      %c0_21 = arith.constant 0 : index
      %23 = vector.load %arg7[%c0_20, %c0_21] : memref<16x128xf32, #tpu.memory_space<vmem>>, vector<16x128xf32>
      tpu.vector_store %arg7[%c0_20, %c0_21], %22 {strides = array<i32>} : memref<16x128xf32, #tpu.memory_space<vmem>>, vector<16x128xf32>,
    } else {
    }
    return
  }
  func.func @transform_0(%arg0: i32, %arg1: i32) -> (i32, i32) {
    %c0_i32 = arith.constant 0 : i32
    %c0_i32_0 = arith.constant 0 : i32
    return %arg0, %c0_i32 : i32, i32
  }
  func.func @transform_1(%arg0: i32, %arg1: i32) -> (i32, i32) {
    %c0_i32 = arith.constant 0 : i32
    %c0_i32_0 = arith.constant 0 : i32
    return %c0_i32, %arg1 : i32, i32
  }
  func.func @transform_2(%arg0: i32, %arg1: i32) -> (i32, i32) {
    %c0_i32 = arith.constant 0 : i32
    %c0_i32_0 = arith.constant 0 : i32
    return %c0_i32, %arg1 : i32, i32
  }
  func.func @transform_3(%arg0: i32, %arg1: i32) -> (i32, i32) {
    %c0_i32 = arith.constant 0 : i32
    %c0_i32_0 = arith.constant 0 : i32
    return %arg1, %c0_i32 : i32, i32
  }
  func.func @transform_4(%arg0: i32, %arg1: i32) -> (i32, i32) {
    %c0_i32 = arith.constant 0 : i32
    %c0_i32_0 = arith.constant 0 : i32
    %c0_i32_1 = arith.constant 0 : i32
    return %c0_i32, %c0_i32_0 : i32, i32
  }
  func.func @transform_5(%arg0: i32, %arg1: i32) -> (i32, i32) {
    %c0_i32 = arith.constant 0 : i32
    %c0_i32_0 = arith.constant 0 : i32
    return %arg0, %c0_i32 : i32, i32
  }
}

</mosaic_0001>

<llo_original>
// kernel: tpu_custom_call.1
$region0: #{tpu_custom_call.1}
  #allocation0 [shape = 'u32[]', space=smem, size = 0x4, offset = 0x4, fixed_abs, tag = 'smem constant byte address 0x4 - core index']
  #allocation1 [shape = 'u32[144,128]{1,0:T(1,128)}', space=vmem, size = 0x12000, scoped, tag = 'internal scratch']
  #allocation2 [shape = 'f32[16,128]{1,0:T(8,128)}', space=vmem, size = 0x2000, scoped, tag = 'scratch operand']
  %s0 = inlined_call_operand.hbm [shape: f32[16,128], index: 0, kind: input, shape index: {}]
  %s1 = inlined_call_operand.hbm [shape: f32[128,512], index: 1, kind: input, shape index: {}]
  %s2 = inlined_call_operand.hbm [shape: f32[1,512], index: 2, kind: input, shape index: {}]
  %s3 = inlined_call_operand.hbm [shape: f32[512,128], index: 3, kind: input, shape index: {}]
  %s4 = inlined_call_operand.vmem [shape: f32[1,128], index: 4, kind: input, shape index: {}]
  %s5 = inlined_call_operand.hbm [shape: f32[16,128], index: 5, kind: output, shape index: {}]
  %s6 = sld [smem:[#allocation0]]
  $region54: #{tpu_custom_call.1} parent=0
    _
  %s8 = ssub.s32 1, %s6
  %s9 = scalar_select 0, %s8, %s6
  $region1: #{tpu_custom_call.1} parent=0
    #allocation3 [shape = 'u8[8192]{0}', space=vmem, size = 0x2000, scoped, tag = 'input window, operand 0, single buffered']
    #allocation4 [shape = 's32[1]{0}', space=sflag, size = 0x4, scoped, tag = 'scoped memory for tpu_custom_call.1']
    #allocation5 [shape = 's32[1]{0}', space=sflag, size = 0x4, scoped, tag = 'scoped memory for tpu_custom_call.1']
    #allocation6 [shape = 'u8[262144]{0}', space=vmem, size = 0x40000, scoped, tag = 'input window, operand 1, single buffered']
    #allocation7 [shape = 's32[1]{0}', space=sflag, size = 0x4, scoped, tag = 'scoped memory for tpu_custom_call.1']
    #allocation8 [shape = 'u8[2048]{0}', space=vmem, size = 0x800, scoped, tag = 'input window, operand 2, single buffered']
    #allocation9 [shape = 'u8[262144]{0}', space=vmem, size = 0x40000, scoped, tag = 'input window, operand 3, single buffered']
    #allocation10 [shape = 's32[1]{0}', space=sflag, size = 0x4, scoped, tag = 'scoped memory for tpu_custom_call.1']
    #allocation11 [shape = 'u8[8192]{0}', space=vmem, size = 0x2000, scoped, tag = 'output window, operand 0, single buffered']
    %10 = vsyncpa [#allocation4], 0
    %11 = vsyncpa [#allocation7], 0
    %12 = vsyncpa [#allocation10], 0
    %13 = vsyncpa [#allocation5], 0
    // Predicated region
    $region2: #{tpu_custom_call.1} parent=1 // pred_check
      _
    $region3: #{tpu_custom_call.1} parent=1 // pred_check_branch
      %15 = sbr.rel (0) target = $region5
    $region4: #{tpu_custom_call.1} parent=1 // pred_region
      %s17 = ssub.s32 256, 256
      %18 = vsyncadd [#allocation4], %s17
      %s19 = sshll.u32 [#allocation3], 4
      %s20 = int_to_ptr.vmem [resolvable:$true] %s19
      %25 = dma.hbm_to_vmem [thread:$0]  %s0, 256, %s20, [#allocation4], 128, 128, 8
    $region5: #{tpu_custom_call.1} parent=1 // pred_fallthru
      _
    // Predicated region
    $region6: #{tpu_custom_call.1} parent=1 // pred_check
      _
    $region7: #{tpu_custom_call.1} parent=1 // pred_check_branch
      %27 = sbr.rel (0) target = $region9
    $region8: #{tpu_custom_call.1} parent=1 // pred_region
      %s29 = ssub.s32 8192, 8192
      %30 = vsyncadd [#allocation7], %s29
      %s31 = sshll.u32 [#allocation6], 4
      %s32 = int_to_ptr.vmem [resolvable:$true] %s31
      %37 = dma.hbm_to_vmem [thread:$0]  %s1, 8192, %s32, [#allocation7], 512, 512, 32
    $region9: #{tpu_custom_call.1} parent=1 // pred_fallthru
      _
    // Predicated region
    $region10: #{tpu_custom_call.1} parent=1 // pred_check
      _
    $region11: #{tpu_custom_call.1} parent=1 // pred_check_branch
      %39 = sbr.rel (0) target = $region13
    $region12: #{tpu_custom_call.1} parent=1 // pred_region
      %s41 = ssub.s32 64, 64
      %42 = vsyncadd [#allocation7], %s41
      %s44 = sshll.u32 [#allocation8], 4
      %s45 = int_to_ptr.vmem [resolvable:$true] %s44
      %47 = dma.hbm_to_vmem [thread:$0]  %s2, 64, %s45, [#allocation7]
    $region13: #{tpu_custom_call.1} parent=1 // pred_fallthru
      _
    // Predicated region
    $region14: #{tpu_custom_call.1} parent=1 // pred_check
      _
    $region15: #{tpu_custom_call.1} parent=1 // pred_check_branch
      %49 = sbr.rel (0) target = $region17
    $region16: #{tpu_custom_call.1} parent=1 // pred_region
      %s51 = ssub.s32 8192, 8192
      %52 = vsyncadd [#allocation10], %s51
      %s53 = sshll.u32 [#allocation9], 4
      %s54 = int_to_ptr.vmem [resolvable:$true] %s53
      %59 = dma.hbm_to_vmem [thread:$0]  %s3, 8192, %s54, [#allocation10], 128, 128, 8
    $region17: #{tpu_custom_call.1} parent=1 // pred_fallthru
      _
    // Predicated region
    $region18: #{tpu_custom_call.1} parent=1 // pred_check
      _
    $region19: #{tpu_custom_call.1} parent=1 // pred_check_branch
      %61 = sbr.rel (0) target = $region21
    $region20: #{tpu_custom_call.1} parent=1 // pred_region
      _
    $region21: #{tpu_custom_call.1} parent=1 // pred_fallthru
      _
    // Predicated region
    $region22: #{tpu_custom_call.1} parent=1 // pred_check
      _
    $region23: #{tpu_custom_call.1} parent=1 // pred_check_branch
      %63 = sbr.rel (0) target = $region25
    $region24: #{tpu_custom_call.1} parent=1 // pred_region
      %64 = dma.done [#allocation4], 256
    $region25: #{tpu_custom_call.1} parent=1 // pred_fallthru
      _
    // Predicated region
    $region26: #{tpu_custom_call.1} parent=1 // pred_check
      _
    $region27: #{tpu_custom_call.1} parent=1 // pred_check_branch
      %66 = sbr.rel (0) target = $region29
    $region28: #{tpu_custom_call.1} parent=1 // pred_region
      %67 = dma.done [#allocation7], 8192
    $region29: #{tpu_custom_call.1} parent=1 // pred_fallthru
      _
    // Predicated region
    $region30: #{tpu_custom_call.1} parent=1 // pred_check
      _
    $region31: #{tpu_custom_call.1} parent=1 // pred_check_branch
      %69 = sbr.rel (0) target = $region33
    $region32: #{tpu_custom_call.1} parent=1 // pred_region
      %70 = dma.done [#allocation7], 64
    $region33: #{tpu_custom_call.1} parent=1 // pred_fallthru
      _
    // Predicated region
    $region34: #{tpu_custom_call.1} parent=1 // pred_check
      _
    $region35: #{tpu_custom_call.1} parent=1 // pred_check_branch
      %72 = sbr.rel (0) target = $region37
    $region36: #{tpu_custom_call.1} parent=1 // pred_region
      %73 = dma.done [#allocation10], 8192
    $region37: #{tpu_custom_call.1} parent=1 // pred_fallthru
      _
    %p74 = scmp.eq.s32.totalorder 0, 0
    // Predicated region
    $region38: #{tpu_custom_call.1} parent=1 // pred_check
      %p75 = pneg %p74
    $region39: #{tpu_custom_call.1} parent=1 // pred_check_branch
      %77 = sbr.rel (%p75) target = $region41
    $region40: #{tpu_custom_call.1} parent=1 // pred_region
      %78 = vst [vmem:[#allocation2] sm:$0xff] 0.0
      %79 = vst [vmem:[#allocation2 + $0x8] sm:$0xff] 0.0
    $region41: #{tpu_custom_call.1} parent=1 // pred_fallthru
      _
    %v80 = vld [vmem:[#allocation3] sm:$0xff]
    %v81 = vld [vmem:[#allocation3 + $0x8] sm:$0xff]
    %v82 = vld [vmem:[#allocation6] sm:$0xff]
    %v83 = vld [vmem:[#allocation6 + $0x8] sm:$0xff]
    %v84 = vld [vmem:[#allocation6 + $0x10] sm:$0xff]
    %v85 = vld [vmem:[#allocation6 + $0x18] sm:$0xff]
    %v86 = vld [vmem:[#allocation6 + $0x20] sm:$0xff]
    %v87 = vld [vmem:[#allocation6 + $0x28] sm:$0xff]
    %v88 = vld [vmem:[#allocation6 + $0x30] sm:$0xff]
    %v89 = vld [vmem:[#allocation6 + $0x38] sm:$0xff]
    %v90 = vld [vmem:[#allocation6 + $0x40] sm:$0xff]
    %v91 = vld [vmem:[#allocation6 + $0x48] sm:$0xff]
    %v92 = vld [vmem:[#allocation6 + $0x50] sm:$0xff]
    %v93 = vld [vmem:[#allocation6 + $0x58] sm:$0xff]
    %v94 = vld [vmem:[#allocation6 + $0x60] sm:$0xff]
    %v95 = vld [vmem:[#allocation6 + $0x68] sm:$0xff]
    %v96 = vld [vmem:[#allocation6 + $0x70] sm:$0xff]
    %v97 = vld [vmem:[#allocation6 + $0x78] sm:$0xff]
    %v98 = vld [vmem:[#allocation6 + $0x80] sm:$0xff]
    %v99 = vld [vmem:[#allocation6 + $0x88] sm:$0xff]
    %v100 = vld [vmem:[#allocation6 + $0x90] sm:$0xff]
    %v101 = vld [vmem:[#allocation6 + $0x98] sm:$0xff]
    %v102 = vld [vmem:[#allocation6 + $0xa0] sm:$0xff]
    %v103 = vld [vmem:[#allocation6 + $0xa8] sm:$0xff]
    %v104 = vld [vmem:[#allocation6 + $0xb0] sm:$0xff]
    %v105 = vld [vmem:[#allocation6 + $0xb8] sm:$0xff]
    %v106 = vld [vmem:[#allocation6 + $0xc0] sm:$0xff]
    %v107 = vld [vmem:[#allocation6 + $0xc8] sm:$0xff]
    %v108 = vld [vmem:[#allocation6 + $0xd0] sm:$0xff]
    %v109 = vld [vmem:[#allocation6 + $0xd8] sm:$0xff]
    %v110 = vld [vmem:[#allocation6 + $0xe0] sm:$0xff]
    %v111 = vld [vmem:[#allocation6 + $0xe8] sm:$0xff]
    %v112 = vld [vmem:[#allocation6 + $0xf0] sm:$0xff]
    %v113 = vld [vmem:[#allocation6 + $0xf8] sm:$0xff]
    %v114 = vld [vmem:[#allocation6 + $0x100] sm:$0xff]
    %v115 = vld [vmem:[#allocation6 + $0x108] sm:$0xff]
    %v116 = vld [vmem:[#allocation6 + $0x110] sm:$0xff]
    %v117 = vld [vmem:[#allocation6 + $0x118] sm:$0xff]
    %v118 = vld [vmem:[#allocation6 + $0x120] sm:$0xff]
    %v119 = vld [vmem:[#allocation6 + $0x128] sm:$0xff]
    %v120 = vld [vmem:[#allocation6 + $0x130] sm:$0xff]
    %v121 = vld [vmem:[#allocation6 + $0x138] sm:$0xff]
    %v122 = vld [vmem:[#allocation6 + $0x140] sm:$0xff]
    %v123 = vld [vmem:[#allocation6 + $0x148] sm:$0xff]
    %v124 = vld [vmem:[#allocation6 + $0x150] sm:$0xff]
    %v125 = vld [vmem:[#allocation6 + $0x158] sm:$0xff]
    %v126 = vld [vmem:[#allocation6 + $0x160] sm:$0xff]
    %v127 = vld [vmem:[#allocation6 + $0x168] sm:$0xff]
    %v128 = vld [vmem:[#allocation6 + $0x170] sm:$0xff]
    %v129 = vld [vmem:[#allocation6 + $0x178] sm:$0xff]
    %v130 = vld [vmem:[#allocation6 + $0x180] sm:$0xff]
    %v131 = vld [vmem:[#allocation6 + $0x188] sm:$0xff]
    %v132 = vld [vmem:[#allocation6 + $0x190] sm:$0xff]
    %v133 = vld [vmem:[#allocation6 + $0x198] sm:$0xff]
    %v134 = vld [vmem:[#allocation6 + $0x1a0] sm:$0xff]
    %v135 = vld [vmem:[#allocation6 + $0x1a8] sm:$0xff]
    %v136 = vld [vmem:[#allocation6 + $0x1b0] sm:$0xff]
    %v137 = vld [vmem:[#allocation6 + $0x1b8] sm:$0xff]
    %v138 = vld [vmem:[#allocation6 + $0x1c0] sm:$0xff]
    %v139 = vld [vmem:[#allocation6 + $0x1c8] sm:$0xff]
    %v140 = vld [vmem:[#allocation6 + $0x1d0] sm:$0xff]
    %v141 = vld [vmem:[#allocation6 + $0x1d8] sm:$0xff]
    %v142 = vld [vmem:[#allocation6 + $0x1e0] sm:$0xff]
    %v143 = vld [vmem:[#allocation6 + $0x1e8] sm:$0xff]
    %v144 = vld [vmem:[#allocation6 + $0x1f0] sm:$0xff]
    %v145 = vld [vmem:[#allocation6 + $0x1f8] sm:$0xff]
    %v146 = vld [vmem:[#allocation8] sm:$0xf]
    %v148 = vlaneseq
    %v149 = vshrl.u32 %v148, 7
    %v150 = vsub.s32 0, %v149
    %v151 = vrot.slane %v146, %v150
    %v152 = vlaneseq
    %v153 = vshrl.u32 %v152, 7
    %v154 = vsub.s32 1, %v153
    %v155 = vrot.slane %v146, %v154
    %v156 = vlaneseq
    %v157 = vshrl.u32 %v156, 7
    %v158 = vsub.s32 2, %v157
    %v159 = vrot.slane %v146, %v158
    %v160 = vlaneseq
    %v161 = vshrl.u32 %v160, 7
    %v162 = vsub.s32 3, %v161
    %v163 = vrot.slane %v146, %v162
    %168 = vmatprep.subr.mxu0 %v143
    %169 = vmatpush1.msra.mxu0 %v142
    %170 = vmatprep.subr.mxu0 %v139
    %171 = vmatpush1.msra.mxu0 %v138
    %172 = vmatprep.subr.mxu0 %v135
    %173 = vmatpush1.msra.mxu0 %v134
    %174 = vmatprep.subr.mxu0 %v131
    %175 = vmatpush1.msra.mxu0 %v130
    %176 = vmatprep.subr.mxu0 %v127
    %177 = vmatpush1.msra.mxu0 %v126
    %178 = vmatprep.subr.mxu0 %v123
    %179 = vmatpush1.msra.mxu0 %v122
    %180 = vmatprep.subr.mxu0 %v119
    %181 = vmatpush1.msra.mxu0 %v118
    %182 = vmatprep.subr.mxu0 %v115
    %183 = vmatpush1.msra.mxu0 %v114
    %184 = vmatprep.subr.mxu0 %v111
    %185 = vmatpush1.msra.mxu0 %v110
    %186 = vmatprep.subr.mxu0 %v107
    %187 = vmatpush1.msra.mxu0 %v106
    %188 = vmatprep.subr.mxu0 %v103
    %189 = vmatpush1.msra.mxu0 %v102
    %190 = vmatprep.subr.mxu0 %v99
    %191 = vmatpush1.msra.mxu0 %v98
    %192 = vmatprep.subr.mxu0 %v95
    %193 = vmatpush1.msra.mxu0 %v94
    %194 = vmatprep.subr.mxu0 %v91
    %195 = vmatpush1.msra.mxu0 %v90
    %196 = vmatprep.subr.mxu0 %v87
    %197 = vmatpush1.msra.mxu0 %v86
    %198 = vmatprep.subr.mxu0 %v83
    %199 = vmatpush1.msra.mxu0 %v82
    %200 = vmatprep.subr.mxu0 0.0
    %201 = vmatpush2.msra.mxu0 0.0
    %202 = vmatprep.subr.mxu0 0.0
    %203 = vmatpush2.msra.mxu0 0.0
    %204 = vmatprep.subr.mxu0 0.0
    %205 = vmatpush2.msra.mxu0 0.0
    %206 = vmatprep.subr.mxu0 0.0
    %207 = vmatpush2.msra.mxu0 0.0
    %208 = vmatprep.subr.mxu0 0.0
    %209 = vmatpush2.msra.mxu0 0.0
    %210 = vmatprep.subr.mxu0 0.0
    %211 = vmatpush2.msra.mxu0 0.0
    %212 = vmatprep.subr.mxu0 0.0
    %213 = vmatpush2.msra.mxu0 0.0
    %214 = vmatprep.subr.mxu0 0.0
    %215 = vmatpush2.msra.mxu0 0.0
    %216 = vmatprep.subr.mxu0 0.0
    %217 = vmatpush2.msra.mxu0 0.0
    %218 = vmatprep.subr.mxu0 0.0
    %219 = vmatpush2.msra.mxu0 0.0
    %220 = vmatprep.subr.mxu0 0.0
    %221 = vmatpush2.msra.mxu0 0.0
    %222 = vmatprep.subr.mxu0 0.0
    %223 = vmatpush2.msra.mxu0 0.0
    %224 = vmatprep.subr.mxu0 0.0
    %225 = vmatpush2.msra.mxu0 0.0
    %226 = vmatprep.subr.mxu0 0.0
    %227 = vmatpush2.msra.mxu0 0.0
    %228 = vmatprep.subr.mxu0 0.0
    %229 = vmatpush2.msra.mxu0 0.0
    %230 = vmatprep.subr.mxu0 0.0
    %231 = vmatpush2.msra.mxu0 0.0
    %232 = vmatprep.mubr.f32.mxu0 0.0
    %233 = vmatmul.mubr.f32.gmra.mxu0 %v80
    %v234 = vpop.f32.mrf.mxu0
    %v235 = vadd.f32 %v151, %v234
    %v236 = vpop.f32.mrf.mxu0
    %v237 = vadd.f32 %v155, %v236
    %238 = vmatprep.mubr.f32.mxu0 0.0
    %239 = vmatmul.mubr.f32.gmra.mxu0 %v81
    %v240 = vpop.f32.mrf.mxu0
    %v241 = vadd.f32 %v151, %v240
    %v242 = vpop.f32.mrf.mxu0
    %v243 = vadd.f32 %v155, %v242
    %244 = vdwg.mxu0
    %245 = vmatprep.subr.mxu0 %v145
    %246 = vmatpush1.msra.mxu0 %v144
    %247 = vmatprep.subr.mxu0 %v141
    %248 = vmatpush1.msra.mxu0 %v140
    %249 = vmatprep.subr.mxu0 %v137
    %250 = vmatpush1.msra.mxu0 %v136
    %251 = vmatprep.subr.mxu0 %v133
    %252 = vmatpush1.msra.mxu0 %v132
    %253 = vmatprep.subr.mxu0 %v129
    %254 = vmatpush1.msra.mxu0 %v128
    %255 = vmatprep.subr.mxu0 %v125
    %256 = vmatpush1.msra.mxu0 %v124
    %257 = vmatprep.subr.mxu0 %v121
    %258 = vmatpush1.msra.mxu0 %v120
    %259 = vmatprep.subr.mxu0 %v117
    %260 = vmatpush1.msra.mxu0 %v116
    %261 = vmatprep.subr.mxu0 %v113
    %262 = vmatpush1.msra.mxu0 %v112
    %263 = vmatprep.subr.mxu0 %v109
    %264 = vmatpush1.msra.mxu0 %v108
    %265 = vmatprep.subr.mxu0 %v105
    %266 = vmatpush1.msra.mxu0 %v104
    %267 = vmatprep.subr.mxu0 %v101
    %268 = vmatpush1.msra.mxu0 %v100
    %269 = vmatprep.subr.mxu0 %v97
    %270 = vmatpush1.msra.mxu0 %v96
    %271 = vmatprep.subr.mxu0 %v93
    %272 = vmatpush1.msra.mxu0 %v92
    %273 = vmatprep.subr.mxu0 %v89
    %274 = vmatpush1.msra.mxu0 %v88
    %275 = vmatprep.subr.mxu0 %v85
    %276 = vmatpush1.msra.mxu0 %v84
    %277 = vmatprep.subr.mxu0 0.0
    %278 = vmatpush2.msra.mxu0 0.0
    %279 = vmatprep.subr.mxu0 0.0
    %280 = vmatpush2.msra.mxu0 0.0
    %281 = vmatprep.subr.mxu0 0.0
    %282 = vmatpush2.msra.mxu0 0.0
    %283 = vmatprep.subr.mxu0 0.0
    %284 = vmatpush2.msra.mxu0 0.0
    %285 = vmatprep.subr.mxu0 0.0
    %286 = vmatpush2.msra.mxu0 0.0
    %287 = vmatprep.subr.mxu0 0.0
    %288 = vmatpush2.msra.mxu0 0.0
    %289 = vmatprep.subr.mxu0 0.0
    %290 = vmatpush2.msra.mxu0 0.0
    %291 = vmatprep.subr.mxu0 0.0
    %292 = vmatpush2.msra.mxu0 0.0
    %293 = vmatprep.subr.mxu0 0.0
    %294 = vmatpush2.msra.mxu0 0.0
    %295 = vmatprep.subr.mxu0 0.0
    %296 = vmatpush2.msra.mxu0 0.0
    %297 = vmatprep.subr.mxu0 0.0
    %298 = vmatpush2.msra.mxu0 0.0
    %299 = vmatprep.subr.mxu0 0.0
    %300 = vmatpush2.msra.mxu0 0.0
    %301 = vmatprep.subr.mxu0 0.0
    %302 = vmatpush2.msra.mxu0 0.0
    %303 = vmatprep.subr.mxu0 0.0
    %304 = vmatpush2.msra.mxu0 0.0
    %305 = vmatprep.subr.mxu0 0.0
    %306 = vmatpush2.msra.mxu0 0.0
    %307 = vmatprep.subr.mxu0 0.0
    %308 = vmatpush2.msra.mxu0 0.0
    %309 = vmatprep.mubr.f32.mxu0 0.0
    %310 = vmatmul.mubr.f32.gmra.mxu0 %v80
    %v311 = vpop.f32.mrf.mxu0
    %v312 = vadd.f32 %v159, %v311
    %v313 = vpop.f32.mrf.mxu0
    %v314 = vadd.f32 %v163, %v313
    %315 = vmatprep.mubr.f32.mxu0 0.0
    %316 = vmatmul.mubr.f32.gmra.mxu0 %v81
    %v317 = vpop.f32.mrf.mxu0
    %v318 = vadd.f32 %v159, %v317
    %v319 = vpop.f32.mrf.mxu0
    %v320 = vadd.f32 %v163, %v319
    %321 = vdwg.mxu0
    %v322 = vmax.f32 %v235, 0.0
    %v323 = vmax.f32 %v237, 0.0
    %v324 = vmax.f32 %v312, 0.0
    %v325 = vmax.f32 %v314, 0.0
    %v326 = vmax.f32 %v241, 0.0
    %v327 = vmax.f32 %v243, 0.0
    %v328 = vmax.f32 %v318, 0.0
    %v329 = vmax.f32 %v320, 0.0
    %v330 = vld [vmem:[#allocation2] sm:$0xff]
    %v331 = vld [vmem:[#allocation2 + $0x8] sm:$0xff]
    %v332 = vld [vmem:[#allocation9] sm:$0xff]
    %v333 = vld [vmem:[#allocation9 + $0x8] sm:$0xff]
    %v334 = vld [vmem:[#allocation9 + $0x10] sm:$0xff]
    %v335 = vld [vmem:[#allocation9 + $0x18] sm:$0xff]
    %v336 = vld [vmem:[#allocation9 + $0x20] sm:$0xff]
    %v337 = vld [vmem:[#allocation9 + $0x28] sm:$0xff]
    %v338 = vld [vmem:[#allocation9 + $0x30] sm:$0xff]
    %v339 = vld [vmem:[#allocation9 + $0x38] sm:$0xff]
    %v340 = vld [vmem:[#allocation9 + $0x40] sm:$0xff]
    %v341 = vld [vmem:[#allocation9 + $0x48] sm:$0xff]
    %v342 = vld [vmem:[#allocation9 + $0x50] sm:$0xff]
    %v343 = vld [vmem:[#allocation9 + $0x58] sm:$0xff]
    %v344 = vld [vmem:[#allocation9 + $0x60] sm:$0xff]
    %v345 = vld [vmem:[#allocation9 + $0x68] sm:$0xff]
    %v346 = vld [vmem:[#allocation9 + $0x70] sm:$0xff]
    %v347 = vld [vmem:[#allocation9 + $0x78] sm:$0xff]
    %v348 = vld [vmem:[#allocation9 + $0x80] sm:$0xff]
    %v349 = vld [vmem:[#allocation9 + $0x88] sm:$0xff]
    %v350 = vld [vmem:[#allocation9 + $0x90] sm:$0xff]
    %v351 = vld [vmem:[#allocation9 + $0x98] sm:$0xff]
    %v352 = vld [vmem:[#allocation9 + $0xa0] sm:$0xff]
    %v353 = vld [vmem:[#allocation9 + $0xa8] sm:$0xff]
    %v354 = vld [vmem:[#allocation9 + $0xb0] sm:$0xff]
    %v355 = vld [vmem:[#allocation9 + $0xb8] sm:$0xff]
    %v356 = vld [vmem:[#allocation9 + $0xc0] sm:$0xff]
    %v357 = vld [vmem:[#allocation9 + $0xc8] sm:$0xff]
    %v358 = vld [vmem:[#allocation9 + $0xd0] sm:$0xff]
    %v359 = vld [vmem:[#allocation9 + $0xd8] sm:$0xff]
    %v360 = vld [vmem:[#allocation9 + $0xe0] sm:$0xff]
    %v361 = vld [vmem:[#allocation9 + $0xe8] sm:$0xff]
    %v362 = vld [vmem:[#allocation9 + $0xf0] sm:$0xff]
    %v363 = vld [vmem:[#allocation9 + $0xf8] sm:$0xff]
    %v364 = vld [vmem:[#allocation9 + $0x100] sm:$0xff]
    %v365 = vld [vmem:[#allocation9 + $0x108] sm:$0xff]
    %v366 = vld [vmem:[#allocation9 + $0x110] sm:$0xff]
    %v367 = vld [vmem:[#allocation9 + $0x118] sm:$0xff]
    %v368 = vld [vmem:[#allocation9 + $0x120] sm:$0xff]
    %v369 = vld [vmem:[#allocation9 + $0x128] sm:$0xff]
    %v370 = vld [vmem:[#allocation9 + $0x130] sm:$0xff]
    %v371 = vld [vmem:[#allocation9 + $0x138] sm:$0xff]
    %v372 = vld [vmem:[#allocation9 + $0x140] sm:$0xff]
    %v373 = vld [vmem:[#allocation9 + $0x148] sm:$0xff]
    %v374 = vld [vmem:[#allocation9 + $0x150] sm:$0xff]
    %v375 = vld [vmem:[#allocation9 + $0x158] sm:$0xff]
    %v376 = vld [vmem:[#allocation9 + $0x160] sm:$0xff]
    %v377 = vld [vmem:[#allocation9 + $0x168] sm:$0xff]
    %v378 = vld [vmem:[#allocation9 + $0x170] sm:$0xff]
    %v379 = vld [vmem:[#allocation9 + $0x178] sm:$0xff]
    %v380 = vld [vmem:[#allocation9 + $0x180] sm:$0xff]
    %v381 = vld [vmem:[#allocation9 + $0x188] sm:$0xff]
    %v382 = vld [vmem:[#allocation9 + $0x190] sm:$0xff]
    %v383 = vld [vmem:[#allocation9 + $0x198] sm:$0xff]
    %v384 = vld [vmem:[#allocation9 + $0x1a0] sm:$0xff]
    %v385 = vld [vmem:[#allocation9 + $0x1a8] sm:$0xff]
    %v386 = vld [vmem:[#allocation9 + $0x1b0] sm:$0xff]
    %v387 = vld [vmem:[#allocation9 + $0x1b8] sm:$0xff]
    %v388 = vld [vmem:[#allocation9 + $0x1c0] sm:$0xff]
    %v389 = vld [vmem:[#allocation9 + $0x1c8] sm:$0xff]
    %v390 = vld [vmem:[#allocation9 + $0x1d0] sm:$0xff]
    %v391 = vld [vmem:[#allocation9 + $0x1d8] sm:$0xff]
    %v392 = vld [vmem:[#allocation9 + $0x1e0] sm:$0xff]
    %v393 = vld [vmem:[#allocation9 + $0x1e8] sm:$0xff]
    %v394 = vld [vmem:[#allocation9 + $0x1f0] sm:$0xff]
    %v395 = vld [vmem:[#allocation9 + $0x1f8] sm:$0xff]
    %396 = vmatprep.subr.mxu0 0.0
    %397 = vmatpush1.msra.mxu0 %v347
    %398 = vmatprep.subr.mxu0 0.0
    %399 = vmatpush1.msra.mxu0 %v346
    %400 = vmatprep.subr.mxu0 0.0
    %401 = vmatpush1.msra.mxu0 %v345
    %402 = vmatprep.subr.mxu0 0.0
    %403 = vmatpush1.msra.mxu0 %v344
    %404 = vmatprep.subr.mxu0 0.0
    %405 = vmatpush1.msra.mxu0 %v343
    %406 = vmatprep.subr.mxu0 0.0
    %407 = vmatpush1.msra.mxu0 %v342
    %408 = vmatprep.subr.mxu0 0.0
    %409 = vmatpush1.msra.mxu0 %v341
    %410 = vmatprep.subr.mxu0 0.0
    %411 = vmatpush1.msra.mxu0 %v340
    %412 = vmatprep.subr.mxu0 0.0
    %413 = vmatpush1.msra.mxu0 %v339
    %414 = vmatprep.subr.mxu0 0.0
    %415 = vmatpush1.msra.mxu0 %v338
    %416 = vmatprep.subr.mxu0 0.0
    %417 = vmatpush1.msra.mxu0 %v337
    %418 = vmatprep.subr.mxu0 0.0
    %419 = vmatpush1.msra.mxu0 %v336
    %420 = vmatprep.subr.mxu0 0.0
    %421 = vmatpush1.msra.mxu0 %v335
    %422 = vmatprep.subr.mxu0 0.0
    %423 = vmatpush1.msra.mxu0 %v334
    %424 = vmatprep.subr.mxu0 0.0
    %425 = vmatpush1.msra.mxu0 %v333
    %426 = vmatprep.subr.mxu0 0.0
    %427 = vmatpush1.msra.mxu0 %v332
    %428 = vmatprep.subr.mxu0 0.0
    %429 = vmatpush2.msra.mxu0 %v363
    %430 = vmatprep.subr.mxu0 0.0
    %431 = vmatpush2.msra.mxu0 %v362
    %432 = vmatprep.subr.mxu0 0.0
    %433 = vmatpush2.msra.mxu0 %v361
    %434 = vmatprep.subr.mxu0 0.0
    %435 = vmatpush2.msra.mxu0 %v360
    %436 = vmatprep.subr.mxu0 0.0
    %437 = vmatpush2.msra.mxu0 %v359
    %438 = vmatprep.subr.mxu0 0.0
    %439 = vmatpush2.msra.mxu0 %v358
    %440 = vmatprep.subr.mxu0 0.0
    %441 = vmatpush2.msra.mxu0 %v357
    %442 = vmatprep.subr.mxu0 0.0
    %443 = vmatpush2.msra.mxu0 %v356
    %444 = vmatprep.subr.mxu0 0.0
    %445 = vmatpush2.msra.mxu0 %v355
    %446 = vmatprep.subr.mxu0 0.0
    %447 = vmatpush2.msra.mxu0 %v354
    %448 = vmatprep.subr.mxu0 0.0
    %449 = vmatpush2.msra.mxu0 %v353
    %450 = vmatprep.subr.mxu0 0.0
    %451 = vmatpush2.msra.mxu0 %v352
    %452 = vmatprep.subr.mxu0 0.0
    %453 = vmatpush2.msra.mxu0 %v351
    %454 = vmatprep.subr.mxu0 0.0
    %455 = vmatpush2.msra.mxu0 %v350
    %456 = vmatprep.subr.mxu0 0.0
    %457 = vmatpush2.msra.mxu0 %v349
    %458 = vmatprep.subr.mxu0 0.0
    %459 = vmatpush2.msra.mxu0 %v348
    %460 = vmatprep.mubr.f32.mxu0 %v323
    %461 = vmatmul.mubr.f32.gmra.mxu0 %v322
    %v462 = vpop.f32.mrf.mxu0
    %v463 = vadd.f32 0.0, %v462
    %v464 = vpop.f32.mrf.mxu0
    %465 = vmatprep.mubr.f32.mxu0 %v327
    %466 = vmatmul.mubr.f32.gmra.mxu0 %v326
    %v467 = vpop.f32.mrf.mxu0
    %v468 = vadd.f32 0.0, %v467
    %v469 = vpop.f32.mrf.mxu0
    %470 = vdwg.mxu0
    %471 = vmatprep.subr.mxu0 0.0
    %472 = vmatpush1.msra.mxu0 %v379
    %473 = vmatprep.subr.mxu0 0.0
    %474 = vmatpush1.msra.mxu0 %v378
    %475 = vmatprep.subr.mxu0 0.0
    %476 = vmatpush1.msra.mxu0 %v377
    %477 = vmatprep.subr.mxu0 0.0
    %478 = vmatpush1.msra.mxu0 %v376
    %479 = vmatprep.subr.mxu0 0.0
    %480 = vmatpush1.msra.mxu0 %v375
    %481 = vmatprep.subr.mxu0 0.0
    %482 = vmatpush1.msra.mxu0 %v374
    %483 = vmatprep.subr.mxu0 0.0
    %484 = vmatpush1.msra.mxu0 %v373
    %485 = vmatprep.subr.mxu0 0.0
    %486 = vmatpush1.msra.mxu0 %v372
    %487 = vmatprep.subr.mxu0 0.0
    %488 = vmatpush1.msra.mxu0 %v371
    %489 = vmatprep.subr.mxu0 0.0
    %490 = vmatpush1.msra.mxu0 %v370
    %491 = vmatprep.subr.mxu0 0.0
    %492 = vmatpush1.msra.mxu0 %v369
    %493 = vmatprep.subr.mxu0 0.0
    %494 = vmatpush1.msra.mxu0 %v368
    %495 = vmatprep.subr.mxu0 0.0
    %496 = vmatpush1.msra.mxu0 %v367
    %497 = vmatprep.subr.mxu0 0.0
    %498 = vmatpush1.msra.mxu0 %v366
    %499 = vmatprep.subr.mxu0 0.0
    %500 = vmatpush1.msra.mxu0 %v365
    %501 = vmatprep.subr.mxu0 0.0
    %502 = vmatpush1.msra.mxu0 %v364
    %503 = vmatprep.subr.mxu0 0.0
    %504 = vmatpush2.msra.mxu0 %v395
    %505 = vmatprep.subr.mxu0 0.0
    %506 = vmatpush2.msra.mxu0 %v394
    %507 = vmatprep.subr.mxu0 0.0
    %508 = vmatpush2.msra.mxu0 %v393
    %509 = vmatprep.subr.mxu0 0.0
    %510 = vmatpush2.msra.mxu0 %v392
    %511 = vmatprep.subr.mxu0 0.0
    %512 = vmatpush2.msra.mxu0 %v391
    %513 = vmatprep.subr.mxu0 0.0
    %514 = vmatpush2.msra.mxu0 %v390
    %515 = vmatprep.subr.mxu0 0.0
    %516 = vmatpush2.msra.mxu0 %v389
    %517 = vmatprep.subr.mxu0 0.0
    %518 = vmatpush2.msra.mxu0 %v388
    %519 = vmatprep.subr.mxu0 0.0
    %520 = vmatpush2.msra.mxu0 %v387
    %521 = vmatprep.subr.mxu0 0.0
    %522 = vmatpush2.msra.mxu0 %v386
    %523 = vmatprep.subr.mxu0 0.0
    %524 = vmatpush2.msra.mxu0 %v385
    %525 = vmatprep.subr.mxu0 0.0
    %526 = vmatpush2.msra.mxu0 %v384
    %527 = vmatprep.subr.mxu0 0.0
    %528 = vmatpush2.msra.mxu0 %v383
    %529 = vmatprep.subr.mxu0 0.0
    %530 = vmatpush2.msra.mxu0 %v382
    %531 = vmatprep.subr.mxu0 0.0
    %532 = vmatpush2.msra.mxu0 %v381
    %533 = vmatprep.subr.mxu0 0.0
    %534 = vmatpush2.msra.mxu0 %v380
    %535 = vmatprep.mubr.f32.mxu0 %v325
    %536 = vmatmul.mubr.f32.gmra.mxu0 %v324
    %v537 = vpop.f32.mrf.mxu0
    %v538 = vadd.f32 %v463, %v537
    %v539 = vpop.f32.mrf.mxu0
    %540 = vmatprep.mubr.f32.mxu0 %v329
    %541 = vmatmul.mubr.f32.gmra.mxu0 %v328
    %v542 = vpop.f32.mrf.mxu0
    %v543 = vadd.f32 %v468, %v542
    %v544 = vpop.f32.mrf.mxu0
    %545 = vdwg.mxu0
    %v546 = vadd.f32 %v330, %v538
    %v547 = vadd.f32 %v331, %v543
    %548 = vst [vmem:[#allocation2] sm:$0xff] %v546
    %549 = vst [vmem:[#allocation2 + $0x8] sm:$0xff] %v547
    // Predicated region
    $region42: #{tpu_custom_call.1} parent=1 // pred_check
      %p550 = pneg %p74
    $region43: #{tpu_custom_call.1} parent=1 // pred_check_branch
      %552 = sbr.rel (%p550) target = $region45
    $region44: #{tpu_custom_call.1} parent=1 // pred_region
      %v553 = vld [vmem:[#allocation2] sm:$0xff]
      %v554 = vld [vmem:[#allocation2 + $0x8] sm:$0xff]
      %v555 = vld [vmem:[%s4] sm:$0x1]
      %v557 = vlaneseq
      %v558 = vshrl.u32 %v557, 7
      %v559 = vsub.s32 0, %v558
      %v560 = vrot.slane %v555, %v559
      %v562 = vadd.f32 %v553, %v560
      %v563 = vadd.f32 %v554, %v560
      %564 = vst [vmem:[#allocation11] sm:$0xff] %v562
      %565 = vst [vmem:[#allocation11 + $0x8] sm:$0xff] %v563
    $region45: #{tpu_custom_call.1} parent=1 // pred_fallthru
      _
    // Predicated region
    $region46: #{tpu_custom_call.1} parent=1 // pred_check
      _
    $region47: #{tpu_custom_call.1} parent=1 // pred_check_branch
      %567 = sbr.rel (0) target = $region49
    $region48: #{tpu_custom_call.1} parent=1 // pred_region
      %s569 = ssub.s32 256, 256
      %570 = vsyncadd [#allocation5], %s569
      %s571 = sshll.u32 [#allocation11], 4
      %s572 = int_to_ptr.vmem [resolvable:$true] %s571
      %577 = dma.vmem_to_hbm [thread:$0]  %s572, 256, %s5, [#allocation5], 128, 128, 8
    $region49: #{tpu_custom_call.1} parent=1 // pred_fallthru
      _
    // Predicated region
    $region50: #{tpu_custom_call.1} parent=1 // pred_check
      _
    $region51: #{tpu_custom_call.1} parent=1 // pred_check_branch
      %579 = sbr.rel (0) target = $region53
    $region52: #{tpu_custom_call.1} parent=1 // pred_region
      %580 = dma.done [#allocation5], 256
    $region53: #{tpu_custom_call.1} parent=1 // pred_fallthru
      _
    %581 = vsyncpa [#allocation4], 1
    %582 = vsyncpa [#allocation7], 1
    %583 = vsyncpa [#allocation10], 1
    %584 = vsyncpa [#allocation5], 1

// kernel: tpu_custom_call.1
$region0: #{tpu_custom_call.1}
  #allocation0 [shape = 'u32[]', space=smem, size = 0x4, offset = 0x4, fixed_abs, tag = 'smem constant byte address 0x4 - core index']
  #allocation1 [shape = 'u32[144,128]{1,0:T(1,128)}', space=vmem, size = 0x12000, scoped, tag = 'internal scratch']
  #allocation2 [shape = 'f32[16,128]{1,0:T(8,128)}', space=vmem, size = 0x2000, scoped, tag = 'scratch operand']
  %s0 = inlined_call_operand.hbm [shape: f32[16,128], index: 0, kind: input, shape index: {}]
  %s1 = inlined_call_operand.hbm [shape: f32[128,512], index: 1, kind: input, shape index: {}]
  %s2 = inlined_call_operand.hbm [shape: f32[1,512], index: 2, kind: input, shape index: {}]
  %s3 = inlined_call_operand.hbm [shape: f32[512,128], index: 3, kind: input, shape index: {}]
  %s4 = inlined_call_operand.vmem [shape: f32[1,128], index: 4, kind: input, shape index: {}]
  %s5 = inlined_call_operand.hbm [shape: f32[16,128], index: 5, kind: output, shape index: {}]
  %s6 = sld [smem:[#allocation0]]
  $region54: #{tpu_custom_call.1} parent=0
    _
  %s8 = ssub.s32 1, %s6
  %s9 = scalar_select 0, %s8, %s6
  $region1: #{tpu_custom_call.1} parent=0
    #allocation3 [shape = 'u8[8192]{0}', space=vmem, size = 0x2000, scoped, tag = 'input window, operand 0, single buffered']
    #allocation4 [shape = 's32[1]{0}', space=sflag, size = 0x4, scoped, tag = 'scoped memory for tpu_custom_call.1']
    #allocation5 [shape = 's32[1]{0}', space=sflag, size = 0x4, scoped, tag = 'scoped memory for tpu_custom_call.1']
    #allocation6 [shape = 'u8[262144]{0}', space=vmem, size = 0x40000, scoped, tag = 'input window, operand 1, single buffered']
    #allocation7 [shape = 's32[1]{0}', space=sflag, size = 0x4, scoped, tag = 'scoped memory for tpu_custom_call.1']
    #allocation8 [shape = 'u8[2048]{0}', space=vmem, size = 0x800, scoped, tag = 'input window, operand 2, single buffered']
    #allocation9 [shape = 'u8[262144]{0}', space=vmem, size = 0x40000, scoped, tag = 'input window, operand 3, single buffered']
    #allocation10 [shape = 's32[1]{0}', space=sflag, size = 0x4, scoped, tag = 'scoped memory for tpu_custom_call.1']
    #allocation11 [shape = 'u8[8192]{0}', space=vmem, size = 0x2000, scoped, tag = 'output window, operand 0, single buffered']
    %10 = vsyncpa [#allocation4], 0
    %11 = vsyncpa [#allocation7], 0
    %12 = vsyncpa [#allocation10], 0
    %13 = vsyncpa [#allocation5], 0
    // Predicated region
    $region2: #{tpu_custom_call.1} parent=1 // pred_check
      _
    $region3: #{tpu_custom_call.1} parent=1 // pred_check_branch
      %15 = sbr.rel (0) target = $region5
    $region4: #{tpu_custom_call.1} parent=1 // pred_region
      %s17 = ssub.s32 256, 256
      %18 = vsyncadd [#allocation4], %s17
      %s19 = sshll.u32 [#allocation3], 4
      %s20 = int_to_ptr.vmem [resolvable:$true] %s19
      %25 = dma.hbm_to_vmem [thread:$0]  %s0, 256, %s20, [#allocation4], 128, 128, 8
    $region5: #{tpu_custom_call.1} parent=1 // pred_fallthru
      _
    // Predicated region
    $region6: #{tpu_custom_call.1} parent=1 // pred_check
      _
    $region7: #{tpu_custom_call.1} parent=1 // pred_check_branch
      %27 = sbr.rel (0) target = $region9
    $region8: #{tpu_custom_call.1} parent=1 // pred_region
      %s29 = ssub.s32 8192, 8192
      %30 = vsyncadd [#allocation7], %s29
      %s31 = sshll.u32 [#allocation6], 4
      %s32 = int_to_ptr.vmem [resolvable:$true] %s31
      %37 = dma.hbm_to_vmem [thread:$0]  %s1, 8192, %s32, [#allocation7], 512, 512, 32
    $region9: #{tpu_custom_call.1} parent=1 // pred_fallthru
      _
    // Predicated region
    $region10: #{tpu_custom_call.1} parent=1 // pred_check
      _
    $region11: #{tpu_custom_call.1} parent=1 // pred_check_branch
      %39 = sbr.rel (0) target = $region13
    $region12: #{tpu_custom_call.1} parent=1 // pred_region
      %s41 = ssub.s32 64, 64
      %42 = vsyncadd [#allocation7], %s41
      %s44 = sshll.u32 [#allocation8], 4
      %s45 = int_to_ptr.vmem [resolvable:$true] %s44
      %47 = dma.hbm_to_vmem [thread:$0]  %s2, 64, %s45, [#allocation7]
    $region13: #{tpu_custom_call.1} parent=1 // pred_fallthru
      _
    // Predicated region
    $region14: #{tpu_custom_call.1} parent=1 // pred_check
      _
    $region15: #{tpu_custom_call.1} parent=1 // pred_check_branch
      %49 = sbr.rel (0) target = $region17
    $region16: #{tpu_custom_call.1} parent=1 // pred_region
      %s51 = ssub.s32 8192, 8192
      %52 = vsyncadd [#allocation10], %s51
      %s53 = sshll.u32 [#allocation9], 4
      %s54 = int_to_ptr.vmem [resolvable:$true] %s53
      %59 = dma.hbm_to_vmem [thread:$0]  %s3, 8192, %s54, [#allocation10], 128, 128, 8
    $region17: #{tpu_custom_call.1} parent=1 // pred_fallthru
      _
    // Predicated region
    $region18: #{tpu_custom_call.1} parent=1 // pred_check
      _
    $region19: #{tpu_custom_call.1} parent=1 // pred_check_branch
      %61 = sbr.rel (0) target = $region21
    $region20: #{tpu_custom_call.1} parent=1 // pred_region
      _
    $region21: #{tpu_custom_call.1} parent=1 // pred_fallthru
      _
    // Predicated region
    $region22: #{tpu_custom_call.1} parent=1 // pred_check
      _
    $region23: #{tpu_custom_call.1} parent=1 // pred_check_branch
      %63 = sbr.rel (0) target = $region25
    $region24: #{tpu_custom_call.1} parent=1 // pred_region
      %64 = dma.done [#allocation4], 256
    $region25: #{tpu_custom_call.1} parent=1 // pred_fallthru
      _
    // Predicated region
    $region26: #{tpu_custom_call.1} parent=1 // pred_check
      _
    $region27: #{tpu_custom_call.1} parent=1 // pred_check_branch
      %66 = sbr.rel (0) target = $region29
    $region28: #{tpu_custom_call.1} parent=1 // pred_region
      %67 = dma.done [#allocation7], 8192
    $region29: #{tpu_custom_call.1} parent=1 // pred_fallthru
      _
    // Predicated region
    $region30: #{tpu_custom_call.1} parent=1 // pred_check
      _
    $region31: #{tpu_custom_call.1} parent=1 // pred_check_branch
      %69 = sbr.rel (0) target = $region33
    $region32: #{tpu_custom_call.1} parent=1 // pred_region
      %70 = dma.done [#allocation7], 64
    $region33: #{tpu_custom_call.1} parent=1 // pred_fallthru
      _
    // Predicated region
    $region34: #{tpu_custom_call.1} parent=1 // pred_check
      _
    $region35: #{tpu_custom_call.1} parent=1 // pred_check_branch
      %72 = sbr.rel (0) target = $region37
    $region36: #{tpu_custom_call.1} parent=1 // pred_region
      %73 = dma.done [#allocation10], 8192
    $region37: #{tpu_custom_call.1} parent=1 // pred_fallthru
      _
    %p74 = scmp.eq.s32.totalorder 0, 0
    // Predicated region
    $region38: #{tpu_custom_call.1} parent=1 // pred_check
      %p75 = pneg %p74
    $region39: #{tpu_custom_call.1} parent=1 // pred_check_branch
      %77 = sbr.rel (%p75) target = $region41
    $region40: #{tpu_custom_call.1} parent=1 // pred_region
      %78 = vst [vmem:[#allocation2] sm:$0xff] 0.0
      %79 = vst [vmem:[#allocation2 + $0x8] sm:$0xff] 0.0
    $region41: #{tpu_custom_call.1} parent=1 // pred_fallthru
      _
    %v80 = vld [vmem:[#allocation3] sm:$0xff]
    %v81 = vld [vmem:[#allocation3 + $0x8] sm:$0xff]
    %v82 = vld [vmem:[#allocation6] sm:$0xff]
    %v83 = vld [vmem:[#allocation6 + $0x8] sm:$0xff]
    %v84 = vld [vmem:[#allocation6 + $0x10] sm:$0xff]
    %v85 = vld [vmem:[#allocation6 + $0x18] sm:$0xff]
    %v86 = vld [vmem:[#allocation6 + $0x20] sm:$0xff]
    %v87 = vld [vmem:[#allocation6 + $0x28] sm:$0xff]
    %v88 = vld [vmem:[#allocation6 + $0x30] sm:$0xff]
    %v89 = vld [vmem:[#allocation6 + $0x38] sm:$0xff]
    %v90 = vld [vmem:[#allocation6 + $0x40] sm:$0xff]
    %v91 = vld [vmem:[#allocation6 + $0x48] sm:$0xff]
    %v92 = vld [vmem:[#allocation6 + $0x50] sm:$0xff]
    %v93 = vld [vmem:[#allocation6 + $0x58] sm:$0xff]
    %v94 = vld [vmem:[#allocation6 + $0x60] sm:$0xff]
    %v95 = vld [vmem:[#allocation6 + $0x68] sm:$0xff]
    %v96 = vld [vmem:[#allocation6 + $0x70] sm:$0xff]
    %v97 = vld [vmem:[#allocation6 + $0x78] sm:$0xff]
    %v98 = vld [vmem:[#allocation6 + $0x80] sm:$0xff]
    %v99 = vld [vmem:[#allocation6 + $0x88] sm:$0xff]
    %v100 = vld [vmem:[#allocation6 + $0x90] sm:$0xff]
    %v101 = vld [vmem:[#allocation6 + $0x98] sm:$0xff]
    %v102 = vld [vmem:[#allocation6 + $0xa0] sm:$0xff]
    %v103 = vld [vmem:[#allocation6 + $0xa8] sm:$0xff]
    %v104 = vld [vmem:[#allocation6 + $0xb0] sm:$0xff]
    %v105 = vld [vmem:[#allocation6 + $0xb8] sm:$0xff]
    %v106 = vld [vmem:[#allocation6 + $0xc0] sm:$0xff]
    %v107 = vld [vmem:[#allocation6 + $0xc8] sm:$0xff]
    %v108 = vld [vmem:[#allocation6 + $0xd0] sm:$0xff]
    %v109 = vld [vmem:[#allocation6 + $0xd8] sm:$0xff]
    %v110 = vld [vmem:[#allocation6 + $0xe0] sm:$0xff]
    %v111 = vld [vmem:[#allocation6 + $0xe8] sm:$0xff]
    %v112 = vld [vmem:[#allocation6 + $0xf0] sm:$0xff]
    %v113 = vld [vmem:[#allocation6 + $0xf8] sm:$0xff]
    %v114 = vld [vmem:[#allocation6 + $0x100] sm:$0xff]
    %v115 = vld [vmem:[#allocation6 + $0x108] sm:$0xff]
    %v116 = vld [vmem:[#allocation6 + $0x110] sm:$0xff]
    %v117 = vld [vmem:[#allocation6 + $0x118] sm:$0xff]
    %v118 = vld [vmem:[#allocation6 + $0x120] sm:$0xff]
    %v119 = vld [vmem:[#allocation6 + $0x128] sm:$0xff]
    %v120 = vld [vmem:[#allocation6 + $0x130] sm:$0xff]
    %v121 = vld [vmem:[#allocation6 + $0x138] sm:$0xff]
    %v122 = vld [vmem:[#allocation6 + $0x140] sm:$0xff]
    %v123 = vld [vmem:[#allocation6 + $0x148] sm:$0xff]
    %v124 = vld [vmem:[#allocation6 + $0x150] sm:$0xff]
    %v125 = vld [vmem:[#allocation6 + $0x158] sm:$0xff]
    %v126 = vld [vmem:[#allocation6 + $0x160] sm:$0xff]
    %v127 = vld [vmem:[#allocation6 + $0x168] sm:$0xff]
    %v128 = vld [vmem:[#allocation6 + $0x170] sm:$0xff]
    %v129 = vld [vmem:[#allocation6 + $0x178] sm:$0xff]
    %v130 = vld [vmem:[#allocation6 + $0x180] sm:$0xff]
    %v131 = vld [vmem:[#allocation6 + $0x188] sm:$0xff]
    %v132 = vld [vmem:[#allocation6 + $0x190] sm:$0xff]
    %v133 = vld [vmem:[#allocation6 + $0x198] sm:$0xff]
    %v134 = vld [vmem:[#allocation6 + $0x1a0] sm:$0xff]
    %v135 = vld [vmem:[#allocation6 + $0x1a8] sm:$0xff]
    %v136 = vld [vmem:[#allocation6 + $0x1b0] sm:$0xff]
    %v137 = vld [vmem:[#allocation6 + $0x1b8] sm:$0xff]
    %v138 = vld [vmem:[#allocation6 + $0x1c0] sm:$0xff]
    %v139 = vld [vmem:[#allocation6 + $0x1c8] sm:$0xff]
    %v140 = vld [vmem:[#allocation6 + $0x1d0] sm:$0xff]
    %v141 = vld [vmem:[#allocation6 + $0x1d8] sm:$0xff]
    %v142 = vld [vmem:[#allocation6 + $0x1e0] sm:$0xff]
    %v143 = vld [vmem:[#allocation6 + $0x1e8] sm:$0xff]
    %v144 = vld [vmem:[#allocation6 + $0x1f0] sm:$0xff]
    %v145 = vld [vmem:[#allocation6 + $0x1f8] sm:$0xff]
    %v146 = vld [vmem:[#allocation8] sm:$0xf]
    %v148 = vlaneseq
    %v149 = vshrl.u32 %v148, 7
    %v150 = vsub.s32 0, %v149
    %v151 = vrot.slane %v146, %v150
    %v152 = vlaneseq
    %v153 = vshrl.u32 %v152, 7
    %v154 = vsub.s32 1, %v153
    %v155 = vrot.slane %v146, %v154
    %v156 = vlaneseq
    %v157 = vshrl.u32 %v156, 7
    %v158 = vsub.s32 2, %v157
    %v159 = vrot.slane %v146, %v158
    %v160 = vlaneseq
    %v161 = vshrl.u32 %v160, 7
    %v162 = vsub.s32 3, %v161
    %v163 = vrot.slane %v146, %v162
    %168 = vmatprep.subr.mxu0 %v143
    %169 = vmatpush1.msra.mxu0 %v142
    %170 = vmatprep.subr.mxu0 %v139
    %171 = vmatpush1.msra.mxu0 %v138
    %172 = vmatprep.subr.mxu0 %v135
    %173 = vmatpush1.msra.mxu0 %v134
    %174 = vmatprep.subr.mxu0 %v131
    %175 = vmatpush1.msra.mxu0 %v130
    %176 = vmatprep.subr.mxu0 %v127
    %177 = vmatpush1.msra.mxu0 %v126
    %178 = vmatprep.subr.mxu0 %v123
    %179 = vmatpush1.msra.mxu0 %v122
    %180 = vmatprep.subr.mxu0 %v119
    %181 = vmatpush1.msra.mxu0 %v118
    %182 = vmatprep.subr.mxu0 %v115
    %183 = vmatpush1.msra.mxu0 %v114
    %184 = vmatprep.subr.mxu0 %v111
    %185 = vmatpush1.msra.mxu0 %v110
    %186 = vmatprep.subr.mxu0 %v107
    %187 = vmatpush1.msra.mxu0 %v106
    %188 = vmatprep.subr.mxu0 %v103
    %189 = vmatpush1.msra.mxu0 %v102
    %190 = vmatprep.subr.mxu0 %v99
    %191 = vmatpush1.msra.mxu0 %v98
    %192 = vmatprep.subr.mxu0 %v95
    %193 = vmatpush1.msra.mxu0 %v94
    %194 = vmatprep.subr.mxu0 %v91
    %195 = vmatpush1.msra.mxu0 %v90
    %196 = vmatprep.subr.mxu0 %v87
    %197 = vmatpush1.msra.mxu0 %v86
    %198 = vmatprep.subr.mxu0 %v83
    %199 = vmatpush1.msra.mxu0 %v82
    %200 = vmatprep.subr.mxu0 0.0
    %201 = vmatpush2.msra.mxu0 0.0
    %202 = vmatprep.subr.mxu0 0.0
    %203 = vmatpush2.msra.mxu0 0.0
    %204 = vmatprep.subr.mxu0 0.0
    %205 = vmatpush2.msra.mxu0 0.0
    %206 = vmatprep.subr.mxu0 0.0
    %207 = vmatpush2.msra.mxu0 0.0
    %208 = vmatprep.subr.mxu0 0.0
    %209 = vmatpush2.msra.mxu0 0.0
    %210 = vmatprep.subr.mxu0 0.0
    %211 = vmatpush2.msra.mxu0 0.0
    %212 = vmatprep.subr.mxu0 0.0
    %213 = vmatpush2.msra.mxu0 0.0
    %214 = vmatprep.subr.mxu0 0.0
    %215 = vmatpush2.msra.mxu0 0.0
    %216 = vmatprep.subr.mxu0 0.0
    %217 = vmatpush2.msra.mxu0 0.0
    %218 = vmatprep.subr.mxu0 0.0
    %219 = vmatpush2.msra.mxu0 0.0
    %220 = vmatprep.subr.mxu0 0.0
    %221 = vmatpush2.msra.mxu0 0.0
    %222 = vmatprep.subr.mxu0 0.0
    %223 = vmatpush2.msra.mxu0 0.0
    %224 = vmatprep.subr.mxu0 0.0
    %225 = vmatpush2.msra.mxu0 0.0
    %226 = vmatprep.subr.mxu0 0.0
    %227 = vmatpush2.msra.mxu0 0.0
    %228 = vmatprep.subr.mxu0 0.0
    %229 = vmatpush2.msra.mxu0 0.0
    %230 = vmatprep.subr.mxu0 0.0
    %231 = vmatpush2.msra.mxu0 0.0
    %232 = vmatprep.mubr.f32.mxu0 0.0
    %233 = vmatmul.mubr.f32.gmra.mxu0 %v80
    %v234 = vpop.f32.mrf.mxu0
    %v235 = vadd.f32 %v151, %v234
    %v236 = vpop.f32.mrf.mxu0
    %v237 = vadd.f32 %v155, %v236
    %238 = vmatprep.mubr.f32.mxu0 0.0
    %239 = vmatmul.mubr.f32.gmra.mxu0 %v81
    %v240 = vpop.f32.mrf.mxu0
    %v241 = vadd.f32 %v151, %v240
    %v242 = vpop.f32.mrf.mxu0
    %v243 = vadd.f32 %v155, %v242
    %244 = vdwg.mxu0
    %245 = vmatprep.subr.mxu0 %v145
    %246 = vmatpush1.msra.mxu0 %v144
    %247 = vmatprep.subr.mxu0 %v141
    %248 = vmatpush1.msra.mxu0 %v140
    %249 = vmatprep.subr.mxu0 %v137
    %250 = vmatpush1.msra.mxu0 %v136
    %251 = vmatprep.subr.mxu0 %v133
    %252 = vmatpush1.msra.mxu0 %v132
    %253 = vmatprep.subr.mxu0 %v129
    %254 = vmatpush1.msra.mxu0 %v128
    %255 = vmatprep.subr.mxu0 %v125
    %256 = vmatpush1.msra.mxu0 %v124
    %257 = vmatprep.subr.mxu0 %v121
    %258 = vmatpush1.msra.mxu0 %v120
    %259 = vmatprep.subr.mxu0 %v117
    %260 = vmatpush1.msra.mxu0 %v116
    %261 = vmatprep.subr.mxu0 %v113
    %262 = vmatpush1.msra.mxu0 %v112
    %263 = vmatprep.subr.mxu0 %v109
    %264 = vmatpush1.msra.mxu0 %v108
    %265 = vmatprep.subr.mxu0 %v105
    %266 = vmatpush1.msra.mxu0 %v104
    %267 = vmatprep.subr.mxu0 %v101
    %268 = vmatpush1.msra.mxu0 %v100
    %269 = vmatprep.subr.mxu0 %v97
    %270 = vmatpush1.msra.mxu0 %v96
    %271 = vmatprep.subr.mxu0 %v93
    %272 = vmatpush1.msra.mxu0 %v92
    %273 = vmatprep.subr.mxu0 %v89
    %274 = vmatpush1.msra.mxu0 %v88
    %275 = vmatprep.subr.mxu0 %v85
    %276 = vmatpush1.msra.mxu0 %v84
    %277 = vmatprep.subr.mxu0 0.0
    %278 = vmatpush2.msra.mxu0 0.0
    %279 = vmatprep.subr.mxu0 0.0
    %280 = vmatpush2.msra.mxu0 0.0
    %281 = vmatprep.subr.mxu0 0.0
    %282 = vmatpush2.msra.mxu0 0.0
    %283 = vmatprep.subr.mxu0 0.0
    %284 = vmatpush2.msra.mxu0 0.0
    %285 = vmatprep.subr.mxu0 0.0
    %286 = vmatpush2.msra.mxu0 0.0
    %287 = vmatprep.subr.mxu0 0.0
    %288 = vmatpush2.msra.mxu0 0.0
    %289 = vmatprep.subr.mxu0 0.0
    %290 = vmatpush2.msra.mxu0 0.0
    %291 = vmatprep.subr.mxu0 0.0
    %292 = vmatpush2.msra.mxu0 0.0
    %293 = vmatprep.subr.mxu0 0.0
    %294 = vmatpush2.msra.mxu0 0.0
    %295 = vmatprep.subr.mxu0 0.0
    %296 = vmatpush2.msra.mxu0 0.0
    %297 = vmatprep.subr.mxu0 0.0
    %298 = vmatpush2.msra.mxu0 0.0
    %299 = vmatprep.subr.mxu0 0.0
    %300 = vmatpush2.msra.mxu0 0.0
    %301 = vmatprep.subr.mxu0 0.0
    %302 = vmatpush2.msra.mxu0 0.0
    %303 = vmatprep.subr.mxu0 0.0
    %304 = vmatpush2.msra.mxu0 0.0
    %305 = vmatprep.subr.mxu0 0.0
    %306 = vmatpush2.msra.mxu0 0.0
    %307 = vmatprep.subr.mxu0 0.0
    %308 = vmatpush2.msra.mxu0 0.0
    %309 = vmatprep.mubr.f32.mxu0 0.0
    %310 = vmatmul.mubr.f32.gmra.mxu0 %v80
    %v311 = vpop.f32.mrf.mxu0
    %v312 = vadd.f32 %v159, %v311
    %v313 = vpop.f32.mrf.mxu0
    %v314 = vadd.f32 %v163, %v313
    %315 = vmatprep.mubr.f32.mxu0 0.0
    %316 = vmatmul.mubr.f32.gmra.mxu0 %v81
    %v317 = vpop.f32.mrf.mxu0
    %v318 = vadd.f32 %v159, %v317
    %v319 = vpop.f32.mrf.mxu0
    %v320 = vadd.f32 %v163, %v319
    %321 = vdwg.mxu0
    %v322 = vmax.f32 %v235, 0.0
    %v323 = vmax.f32 %v237, 0.0
    %v324 = vmax.f32 %v312, 0.0
    %v325 = vmax.f32 %v314, 0.0
    %v326 = vmax.f32 %v241, 0.0
    %v327 = vmax.f32 %v243, 0.0
    %v328 = vmax.f32 %v318, 0.0
    %v329 = vmax.f32 %v320, 0.0
    %v330 = vld [vmem:[#allocation2] sm:$0xff]
    %v331 = vld [vmem:[#allocation2 + $0x8] sm:$0xff]
    %v332 = vld [vmem:[#allocation9] sm:$0xff]
    %v333 = vld [vmem:[#allocation9 + $0x8] sm:$0xff]
    %v334 = vld [vmem:[#allocation9 + $0x10] sm:$0xff]
    %v335 = vld [vmem:[#allocation9 + $0x18] sm:$0xff]
    %v336 = vld [vmem:[#allocation9 + $0x20] sm:$0xff]
    %v337 = vld [vmem:[#allocation9 + $0x28] sm:$0xff]
    %v338 = vld [vmem:[#allocation9 + $0x30] sm:$0xff]
    %v339 = vld [vmem:[#allocation9 + $0x38] sm:$0xff]
    %v340 = vld [vmem:[#allocation9 + $0x40] sm:$0xff]
    %v341 = vld [vmem:[#allocation9 + $0x48] sm:$0xff]
    %v342 = vld [vmem:[#allocation9 + $0x50] sm:$0xff]
    %v343 = vld [vmem:[#allocation9 + $0x58] sm:$0xff]
    %v344 = vld [vmem:[#allocation9 + $0x60] sm:$0xff]
    %v345 = vld [vmem:[#allocation9 + $0x68] sm:$0xff]
    %v346 = vld [vmem:[#allocation9 + $0x70] sm:$0xff]
    %v347 = vld [vmem:[#allocation9 + $0x78] sm:$0xff]
    %v348 = vld [vmem:[#allocation9 + $0x80] sm:$0xff]
    %v349 = vld [vmem:[#allocation9 + $0x88] sm:$0xff]
    %v350 = vld [vmem:[#allocation9 + $0x90] sm:$0xff]
    %v351 = vld [vmem:[#allocation9 + $0x98] sm:$0xff]
    %v352 = vld [vmem:[#allocation9 + $0xa0] sm:$0xff]
    %v353 = vld [vmem:[#allocation9 + $0xa8] sm:$0xff]
    %v354 = vld [vmem:[#allocation9 + $0xb0] sm:$0xff]
    %v355 = vld [vmem:[#allocation9 + $0xb8] sm:$0xff]
    %v356 = vld [vmem:[#allocation9 + $0xc0] sm:$0xff]
    %v357 = vld [vmem:[#allocation9 + $0xc8] sm:$0xff]
    %v358 = vld [vmem:[#allocation9 + $0xd0] sm:$0xff]
    %v359 = vld [vmem:[#allocation9 + $0xd8] sm:$0xff]
    %v360 = vld [vmem:[#allocation9 + $0xe0] sm:$0xff]
    %v361 = vld [vmem:[#allocation9 + $0xe8] sm:$0xff]
    %v362 = vld [vmem:[#allocation9 + $0xf0] sm:$0xff]
    %v363 = vld [vmem:[#allocation9 + $0xf8] sm:$0xff]
    %v364 = vld [vmem:[#allocation9 + $0x100] sm:$0xff]
    %v365 = vld [vmem:[#allocation9 + $0x108] sm:$0xff]
    %v366 = vld [vmem:[#allocation9 + $0x110] sm:$0xff]
    %v367 = vld [vmem:[#allocation9 + $0x118] sm:$0xff]
    %v368 = vld [vmem:[#allocation9 + $0x120] sm:$0xff]
    %v369 = vld [vmem:[#allocation9 + $0x128] sm:$0xff]
    %v370 = vld [vmem:[#allocation9 + $0x130] sm:$0xff]
    %v371 = vld [vmem:[#allocation9 + $0x138] sm:$0xff]
    %v372 = vld [vmem:[#allocation9 + $0x140] sm:$0xff]
    %v373 = vld [vmem:[#allocation9 + $0x148] sm:$0xff]
    %v374 = vld [vmem:[#allocation9 + $0x150] sm:$0xff]
    %v375 = vld [vmem:[#allocation9 + $0x158] sm:$0xff]
    %v376 = vld [vmem:[#allocation9 + $0x160] sm:$0xff]
    %v377 = vld [vmem:[#allocation9 + $0x168] sm:$0xff]
    %v378 = vld [vmem:[#allocation9 + $0x170] sm:$0xff]
    %v379 = vld [vmem:[#allocation9 + $0x178] sm:$0xff]
    %v380 = vld [vmem:[#allocation9 + $0x180] sm:$0xff]
    %v381 = vld [vmem:[#allocation9 + $0x188] sm:$0xff]
    %v382 = vld [vmem:[#allocation9 + $0x190] sm:$0xff]
    %v383 = vld [vmem:[#allocation9 + $0x198] sm:$0xff]
    %v384 = vld [vmem:[#allocation9 + $0x1a0] sm:$0xff]
    %v385 = vld [vmem:[#allocation9 + $0x1a8] sm:$0xff]
    %v386 = vld [vmem:[#allocation9 + $0x1b0] sm:$0xff]
    %v387 = vld [vmem:[#allocation9 + $0x1b8] sm:$0xff]
    %v388 = vld [vmem:[#allocation9 + $0x1c0] sm:$0xff]
    %v389 = vld [vmem:[#allocation9 + $0x1c8] sm:$0xff]
    %v390 = vld [vmem:[#allocation9 + $0x1d0] sm:$0xff]
    %v391 = vld [vmem:[#allocation9 + $0x1d8] sm:$0xff]
    %v392 = vld [vmem:[#allocation9 + $0x1e0] sm:$0xff]
    %v393 = vld [vmem:[#allocation9 + $0x1e8] sm:$0xff]
    %v394 = vld [vmem:[#allocation9 + $0x1f0] sm:$0xff]
    %v395 = vld [vmem:[#allocation9 + $0x1f8] sm:$0xff]
    %396 = vmatprep.subr.mxu0 0.0
    %397 = vmatpush1.msra.mxu0 %v347
    %398 = vmatprep.subr.mxu0 0.0
    %399 = vmatpush1.msra.mxu0 %v346
    %400 = vmatprep.subr.mxu0 0.0
    %401 = vmatpush1.msra.mxu0 %v345
    %402 = vmatprep.subr.mxu0 0.0
    %403 = vmatpush1.msra.mxu0 %v344
    %404 = vmatprep.subr.mxu0 0.0
    %405 = vmatpush1.msra.mxu0 %v343
    %406 = vmatprep.subr.mxu0 0.0
    %407 = vmatpush1.msra.mxu0 %v342
    %408 = vmatprep.subr.mxu0 0.0
    %409 = vmatpush1.msra.mxu0 %v341
    %410 = vmatprep.subr.mxu0 0.0
    %411 = vmatpush1.msra.mxu0 %v340
    %412 = vmatprep.subr.mxu0 0.0
    %413 = vmatpush1.msra.mxu0 %v339
    %414 = vmatprep.subr.mxu0 0.0
    %415 = vmatpush1.msra.mxu0 %v338
    %416 = vmatprep.subr.mxu0 0.0
    %417 = vmatpush1.msra.mxu0 %v337
    %418 = vmatprep.subr.mxu0 0.0
    %419 = vmatpush1.msra.mxu0 %v336
    %420 = vmatprep.subr.mxu0 0.0
    %421 = vmatpush1.msra.mxu0 %v335
    %422 = vmatprep.subr.mxu0 0.0
    %423 = vmatpush1.msra.mxu0 %v334
    %424 = vmatprep.subr.mxu0 0.0
    %425 = vmatpush1.msra.mxu0 %v333
    %426 = vmatprep.subr.mxu0 0.0
    %427 = vmatpush1.msra.mxu0 %v332
    %428 = vmatprep.subr.mxu0 0.0
    %429 = vmatpush2.msra.mxu0 %v363
    %430 = vmatprep.subr.mxu0 0.0
    %431 = vmatpush2.msra.mxu0 %v362
    %432 = vmatprep.subr.mxu0 0.0
    %433 = vmatpush2.msra.mxu0 %v361
    %434 = vmatprep.subr.mxu0 0.0
    %435 = vmatpush2.msra.mxu0 %v360
    %436 = vmatprep.subr.mxu0 0.0
    %437 = vmatpush2.msra.mxu0 %v359
    %438 = vmatprep.subr.mxu0 0.0
    %439 = vmatpush2.msra.mxu0 %v358
    %440 = vmatprep.subr.mxu0 0.0
    %441 = vmatpush2.msra.mxu0 %v357
    %442 = vmatprep.subr.mxu0 0.0
    %443 = vmatpush2.msra.mxu0 %v356
    %444 = vmatprep.subr.mxu0 0.0
    %445 = vmatpush2.msra.mxu0 %v355
    %446 = vmatprep.subr.mxu0 0.0
    %447 = vmatpush2.msra.mxu0 %v354
    %448 = vmatprep.subr.mxu0 0.0
    %449 = vmatpush2.msra.mxu0 %v353
    %450 = vmatprep.subr.mxu0 0.0
    %451 = vmatpush2.msra.mxu0 %v352
    %452 = vmatprep.subr.mxu0 0.0
    %453 = vmatpush2.msra.mxu0 %v351
    %454 = vmatprep.subr.mxu0 0.0
    %455 = vmatpush2.msra.mxu0 %v350
    %456 = vmatprep.subr.mxu0 0.0
    %457 = vmatpush2.msra.mxu0 %v349
    %458 = vmatprep.subr.mxu0 0.0
    %459 = vmatpush2.msra.mxu0 %v348
    %460 = vmatprep.mubr.f32.mxu0 %v323
    %461 = vmatmul.mubr.f32.gmra.mxu0 %v322
    %v462 = vpop.f32.mrf.mxu0
    %v463 = vadd.f32 0.0, %v462
    %v464 = vpop.f32.mrf.mxu0
    %465 = vmatprep.mubr.f32.mxu0 %v327
    %466 = vmatmul.mubr.f32.gmra.mxu0 %v326
    %v467 = vpop.f32.mrf.mxu0
    %v468 = vadd.f32 0.0, %v467
    %v469 = vpop.f32.mrf.mxu0
    %470 = vdwg.mxu0
    %471 = vmatprep.subr.mxu0 0.0
    %472 = vmatpush1.msra.mxu0 %v379
    %473 = vmatprep.subr.mxu0 0.0
    %474 = vmatpush1.msra.mxu0 %v378
    %475 = vmatprep.subr.mxu0 0.0
    %476 = vmatpush1.msra.mxu0 %v377
    %477 = vmatprep.subr.mxu0 0.0
    %478 = vmatpush1.msra.mxu0 %v376
    %479 = vmatprep.subr.mxu0 0.0
    %480 = vmatpush1.msra.mxu0 %v375
    %481 = vmatprep.subr.mxu0 0.0
    %482 = vmatpush1.msra.mxu0 %v374
    %483 = vmatprep.subr.mxu0 0.0
    %484 = vmatpush1.msra.mxu0 %v373
    %485 = vmatprep.subr.mxu0 0.0
    %486 = vmatpush1.msra.mxu0 %v372
    %487 = vmatprep.subr.mxu0 0.0
    %488 = vmatpush1.msra.mxu0 %v371
    %489 = vmatprep.subr.mxu0 0.0
    %490 = vmatpush1.msra.mxu0 %v370
    %491 = vmatprep.subr.mxu0 0.0
    %492 = vmatpush1.msra.mxu0 %v369
    %493 = vmatprep.subr.mxu0 0.0
    %494 = vmatpush1.msra.mxu0 %v368
    %495 = vmatprep.subr.mxu0 0.0
    %496 = vmatpush1.msra.mxu0 %v367
    %497 = vmatprep.subr.mxu0 0.0
    %498 = vmatpush1.msra.mxu0 %v366
    %499 = vmatprep.subr.mxu0 0.0
    %500 = vmatpush1.msra.mxu0 %v365
    %501 = vmatprep.subr.mxu0 0.0
    %502 = vmatpush1.msra.mxu0 %v364
    %503 = vmatprep.subr.mxu0 0.0
    %504 = vmatpush2.msra.mxu0 %v395
    %505 = vmatprep.subr.mxu0 0.0
    %506 = vmatpush2.msra.mxu0 %v394
    %507 = vmatprep.subr.mxu0 0.0
    %508 = vmatpush2.msra.mxu0 %v393
    %509 = vmatprep.subr.mxu0 0.0
    %510 = vmatpush2.msra.mxu0 %v392
    %511 = vmatprep.subr.mxu0 0.0
    %512 = vmatpush2.msra.mxu0 %v391
    %513 = vmatprep.subr.mxu0 0.0
    %514 = vmatpush2.msra.mxu0 %v390
    %515 = vmatprep.subr.mxu0 0.0
    %516 = vmatpush2.msra.mxu0 %v389
    %517 = vmatprep.subr.mxu0 0.0
    %518 = vmatpush2.msra.mxu0 %v388
    %519 = vmatprep.subr.mxu0 0.0
    %520 = vmatpush2.msra.mxu0 %v387
    %521 = vmatprep.subr.mxu0 0.0
    %522 = vmatpush2.msra.mxu0 %v386
    %523 = vmatprep.subr.mxu0 0.0
    %524 = vmatpush2.msra.mxu0 %v385
    %525 = vmatprep.subr.mxu0 0.0
    %526 = vmatpush2.msra.mxu0 %v384
    %527 = vmatprep.subr.mxu0 0.0
    %528 = vmatpush2.msra.mxu0 %v383
    %529 = vmatprep.subr.mxu0 0.0
    %530 = vmatpush2.msra.mxu0 %v382
    %531 = vmatprep.subr.mxu0 0.0
    %532 = vmatpush2.msra.mxu0 %v381
    %533 = vmatprep.subr.mxu0 0.0
    %534 = vmatpush2.msra.mxu0 %v380
    %535 = vmatprep.mubr.f32.mxu0 %v325
    %536 = vmatmul.mubr.f32.gmra.mxu0 %v324
    %v537 = vpop.f32.mrf.mxu0
    %v538 = vadd.f32 %v463, %v537
    %v539 = vpop.f32.mrf.mxu0
    %540 = vmatprep.mubr.f32.mxu0 %v329
    %541 = vmatmul.mubr.f32.gmra.mxu0 %v328
    %v542 = vpop.f32.mrf.mxu0
    %v543 = vadd.f32 %v468, %v542
    %v544 = vpop.f32.mrf.mxu0
    %545 = vdwg.mxu0
    %v546 = vadd.f32 %v330, %v538
    %v547 = vadd.f32 %v331, %v543
    %548 = vst [vmem:[#allocation2] sm:$0xff] %v546
    %549 = vst [vmem:[#allocation2 + $0x8] sm:$0xff] %v547
    // Predicated region
    $region42: #{tpu_custom_call.1} parent=1 // pred_check
      %p550 = pneg %p74
    $region43: #{tpu_custom_call.1} parent=1 // pred_check_branch
      %552 = sbr.rel (%p550) target = $region45
    $region44: #{tpu_custom_call.1} parent=1 // pred_region
      %v553 = vld [vmem:[#allocation2] sm:$0xff]
      %v554 = vld [vmem:[#allocation2 + $0x8] sm:$0xff]
      %v555 = vld [vmem:[%s4] sm:$0x1]
      %v557 = vlaneseq
      %v558 = vshrl.u32 %v557, 7
      %v559 = vsub.s32 0, %v558
      %v560 = vrot.slane %v555, %v559
      %v562 = vadd.f32 %v553, %v560
      %v563 = vadd.f32 %v554, %v560
      %564 = vst [vmem:[#allocation11] sm:$0xff] %v562
      %565 = vst [vmem:[#allocation11 + $0x8] sm:$0xff] %v563
    $region45: #{tpu_custom_call.1} parent=1 // pred_fallthru
      _
    // Predicated region
    $region46: #{tpu_custom_call.1} parent=1 // pred_check
      _
    $region47: #{tpu_custom_call.1} parent=1 // pred_check_branch
      %567 = sbr.rel (0) target = $region49
    $region48: #{tpu_custom_call.1} parent=1 // pred_region
      %s569 = ssub.s32 256, 256
      %570 = vsyncadd [#allocation5], %s569
      %s571 = sshll.u32 [#allocation11], 4
      %s572 = int_to_ptr.vmem [resolvable:$true] %s571
      %577 = dma.vmem_to_hbm [thread:$0]  %s572, 256, %s5, [#allocation5], 128, 128, 8
    $region49: #{tpu_custom_call.1} parent=1 // pred_fallthru
      _
    // Predicated region
    $region50: #{tpu_custom_call.1} parent=1 // pred_check
      _
    $region51: #{tpu_custom_call.1} parent=1 // pred_check_branch
      %579 = sbr.rel (0) target = $region53
    $region52: #{tpu_custom_call.1} parent=1 // pred_region
      %580 = dma.done [#allocation5], 256
    $region53: #{tpu_custom_call.1} parent=1 // pred_fallthru
      _
    %581 = vsyncpa [#allocation4], 1
    %582 = vsyncpa [#allocation7], 1
    %583 = vsyncpa [#allocation10], 1
    %584 = vsyncpa [#allocation5], 1

</llo_original>
